<compile_context>
chip_gen: v7x
topology: tpu7x:2x2x1
jax: 0.10.0
libtpu: 0.0.40
codegen_flags: <defaults>
</compile_context>

<pallas_src>
import jax
import jax.numpy as jnp
from jax.experimental import pallas as pl
from jax.experimental.pallas import tpu as pltpu


def conv3x3_relu_kernel(xp_ref, wt_ref, o_ref):
    """Direct 3x3 conv (stride 1, padding pre-applied) + Identity norm + ReLU
    for one batch element, with Cout packed into the lane dimension.

    xp_ref: VMEM (1, Cin, H+2, W+2) f32  zero-padded input image
    wt_ref: VMEM (9*Cin, Cout*W)    f32  lane-dense weight table,
                                         row (kh*3+kw)*Cin+ci, lane co*W+j == w[co,ci,kh,kw]
    o_ref : VMEM (1, H, Cout*W)     f32  lane-packed output, lane co*W+j == y[co, :, j]
    """
    _, H, CW = o_ref.shape
    Cin = xp_ref.shape[1]
    W = xp_ref.shape[3] - 2
    Cout = CW // W

    # Single lane-dense f32 accumulator: (H, Cout*W) == (16, 128) here.
    acc = jnp.zeros((H, CW), dtype=jnp.float32)

    for kh in range(3):
        for kw in range(3):
            for ci in range(Cin):
                # Shifted window loaded directly from VMEM (load slots idle).
                win = xp_ref[0, ci, kh:kh + H, kw:kw + W]          # (H, W)
                # Replicate across the Cout lane-groups -> (H, Cout*W).
                win_rep = jnp.concatenate([win] * Cout, axis=-1)
                tap = (kh * 3 + kw) * Cin + ci
                w_row = wt_ref[tap:tap + 1, :]                     # (1, Cout*W)
                # Full-vreg VPU MAC (broadcast over sublanes).
                acc = acc + w_row * win_rep

    # norm_cfg=None -> nn.Identity(); then ReLU; one unmasked lane-dense store.
    o_ref[0, :, :] = jnp.maximum(acc, 0.0).astype(o_ref.dtype)


def generator_basic_block(x_nchw, weight_oihw):
    """x_nchw: (N, Cin, H, W) f32; weight_oihw: (Cout, Cin, 3, 3) f32.

    Returns (N, Cout, H, W) f32, matching GeneratorBasicBlock.forward with the
    default constructor arguments.
    """
    N, Cin, H, W = x_nchw.shape
    Cout = weight_oihw.shape[0]

    # padding=1 zero pad as wrapper glue; layout stays NCHW.
    x_pad = jnp.pad(x_nchw, ((0, 0), (0, 0), (1, 1), (1, 1))).astype(jnp.float32)

    # Lane-dense weight table: wt[(kh*3+kw)*Cin+ci, co*W+j] = weight[co,ci,kh,kw].
    wt = jnp.transpose(weight_oihw, (2, 3, 1, 0)).reshape(9 * Cin, Cout)
    wt = jnp.repeat(wt[:, :, None], W, axis=2).reshape(9 * Cin, Cout * W)
    wt = wt.astype(jnp.float32)

    cost = pl.CostEstimate(
        flops=2 * N * Cout * H * W * Cin * 9,
        transcendentals=0,
        bytes_accessed=int(x_pad.size + wt.size + N * H * Cout * W) * 4,
    )

    out_packed = pl.pallas_call(
        conv3x3_relu_kernel,
        out_shape=jax.ShapeDtypeStruct((N, H, Cout * W), jnp.float32),
        grid_spec=pltpu.PrefetchScalarGridSpec(
            num_scalar_prefetch=0,
            grid=(N,),
            in_specs=[
                # Whole padded image of one batch element per grid step (~5 KB).
                pl.BlockSpec((1, Cin, H + 2, W + 2), lambda n: (n, 0, 0, 0)),
                # Weight table: constant block index -> fetched once, resident.
                pl.BlockSpec((9 * Cin, Cout * W), lambda n: (0, 0)),
            ],
            out_specs=pl.BlockSpec((1, H, Cout * W), lambda n: (n, 0, 0)),
        ),
        compiler_params=pltpu.CompilerParams(
            dimension_semantics=("parallel",)),
        cost_estimate=cost,
    )(x_pad, wt)

    # Unpack the lane-dense output slab back to NCHW (layout plumbing only).
    out = out_packed.reshape(N, H, Cout, W).transpose(0, 2, 1, 3)
    return out.astype(x_nchw.dtype)


if __name__ == "__main__":
    key = jax.random.PRNGKey(0)
    k_x, k_w = jax.random.split(key)

    # Small shapes consistent with the module: batch=2, in_features=4,
    # out_features=8, spatial=16x16  ->  Cout*W = 128 (one full lane width).
    N, Cin, Cout, H, W = 2, 4, 8, 16, 16
    x = jax.random.normal(k_x, (N, Cin, H, W), dtype=jnp.float32)
    weight = jax.random.normal(k_w, (Cout, Cin, 3, 3), dtype=jnp.float32) * 0.1

    out = generator_basic_block(x, weight)
    out = jax.block_until_ready(out)

    # Correctness check against XLA's reference conv + ReLU.
    ref = jax.lax.conv_general_dilated(
        x, weight, window_strides=(1, 1), padding=((1, 1), (1, 1)),
        dimension_numbers=("NCHW", "OIHW", "NCHW"))
    ref = jnp.maximum(ref, 0.0)
    assert out.shape == (N, Cout, H, W)
    assert jnp.allclose(out, ref, atol=1e-4, rtol=1e-4)

    # TODO(synk): do_upsample / do_downsample / norm_cfg != None branches are not
    # exercised by the default constructor and are not implemented here.
    print("KERNEL_OK")
</pallas_src>

<mosaic_0001>
module attributes {stable_mosaic.version = 11 : i64} {
  func.func @conv3x3_relu_kernel(%arg0: i32, %arg1: memref<1x4x18x18xf32, #tpu.memory_space<vmem>>, %arg2: memref<36x128xf32, #tpu.memory_space<vmem>>, %arg3: memref<1x16x128xf32, #tpu.memory_space<vmem>>) attributes {dimension_semantics = [#tpu.dimension_semantics<parallel>], iteration_bounds = array<i64: 2>, scalar_prefetch = 0 : i64, scratch_operands = 0 : i64, tpu.core_type = #tpu.core_type<tc>, window_params = [{transform_indices = @transform_0, window_bounds = array<i64: 1, 4, 18, 18>}, {pipeline_mode = #tpu.pipeline_mode<synchronous>, transform_indices = @transform_1, window_bounds = array<i64: 36, 128>}, {transform_indices = @transform_2, window_bounds = array<i64: 1, 16, 128>}]} {
    %cst = arith.constant 0.000000e+00 : f32
    %0 = vector.broadcast %cst : f32 to vector<16x128xf32>
    %c0 = arith.constant 0 : index
    %c0_0 = arith.constant 0 : index
    %c0_1 = arith.constant 0 : index
    %c0_2 = arith.constant 0 : index
    %1 = vector.load %arg1[%c0, %c0_0, %c0_1, %c0_2] : memref<1x4x18x18xf32, #tpu.memory_space<vmem>>, vector<1x1x16x16xf32>
    %2 = vector.shape_cast %1 : vector<1x1x16x16xf32> to vector<16x16xf32>
    %3 = tpu.concatenate %2, %2, %2, %2, %2, %2, %2, %2 in 1 : vector<16x16xf32>, vector<16x16xf32>, vector<16x16xf32>, vector<16x16xf32>, vector<16x16xf32>, vector<16x16xf32>, vector<16x16xf32>, vector<16x16xf32> -> vector<16x128xf32>
    %c0_3 = arith.constant 0 : index
    %c0_4 = arith.constant 0 : index
    %4 = vector.load %arg2[%c0_3, %c0_4] : memref<36x128xf32, #tpu.memory_space<vmem>>, vector<1x128xf32>
    %5 = vector.broadcast %4 : vector<1x128xf32> to vector<16x128xf32>
    %6 = arith.mulf %5, %3 : vector<16x128xf32>
    %7 = arith.addf %0, %6 : vector<16x128xf32>
    %c0_5 = arith.constant 0 : index
    %c1 = arith.constant 1 : index
    %c0_6 = arith.constant 0 : index
    %c0_7 = arith.constant 0 : index
    %8 = vector.load %arg1[%c0_5, %c1, %c0_6, %c0_7] : memref<1x4x18x18xf32, #tpu.memory_space<vmem>>, vector<1x1x16x16xf32>
    %9 = vector.shape_cast %8 : vector<1x1x16x16xf32> to vector<16x16xf32>
    %10 = tpu.concatenate %9, %9, %9, %9, %9, %9, %9, %9 in 1 : vector<16x16xf32>, vector<16x16xf32>, vector<16x16xf32>, vector<16x16xf32>, vector<16x16xf32>, vector<16x16xf32>, vector<16x16xf32>, vector<16x16xf32> -> vector<16x128xf32>
    %c1_8 = arith.constant 1 : index
    %c0_9 = arith.constant 0 : index
    %11 = vector.load %arg2[%c1_8, %c0_9] : memref<36x128xf32, #tpu.memory_space<vmem>>, vector<1x128xf32>
    %12 = vector.broadcast %11 : vector<1x128xf32> to vector<16x128xf32>
    %13 = arith.mulf %12, %10 : vector<16x128xf32>
    %14 = arith.addf %7, %13 : vector<16x128xf32>
    %c0_10 = arith.constant 0 : index
    %c2 = arith.constant 2 : index
    %c0_11 = arith.constant 0 : index
    %c0_12 = arith.constant 0 : index
    %15 = vector.load %arg1[%c0_10, %c2, %c0_11, %c0_12] : memref<1x4x18x18xf32, #tpu.memory_space<vmem>>, vector<1x1x16x16xf32>
    %16 = vector.shape_cast %15 : vector<1x1x16x16xf32> to vector<16x16xf32>
    %17 = tpu.concatenate %16, %16, %16, %16, %16, %16, %16, %16 in 1 : vector<16x16xf32>, vector<16x16xf32>, vector<16x16xf32>, vector<16x16xf32>, vector<16x16xf32>, vector<16x16xf32>, vector<16x16xf32>, vector<16x16xf32> -> vector<16x128xf32>
    %c2_13 = arith.constant 2 : index
    %c0_14 = arith.constant 0 : index
    %18 = vector.load %arg2[%c2_13, %c0_14] : memref<36x128xf32, #tpu.memory_space<vmem>>, vector<1x128xf32>
    %19 = vector.broadcast %18 : vector<1x128xf32> to vector<16x128xf32>
    %20 = arith.mulf %19, %17 : vector<16x128xf32>
    %21 = arith.addf %14, %20 : vector<16x128xf32>
    %c0_15 = arith.constant 0 : index
    %c3 = arith.constant 3 : index
    %c0_16 = arith.constant 0 : index
    %c0_17 = arith.constant 0 : index
    %22 = vector.load %arg1[%c0_15, %c3, %c0_16, %c0_17] : memref<1x4x18x18xf32, #tpu.memory_space<vmem>>, vector<1x1x16x16xf32>
    %23 = vector.shape_cast %22 : vector<1x1x16x16xf32> to vector<16x16xf32>
    %24 = tpu.concatenate %23, %23, %23, %23, %23, %23, %23, %23 in 1 : vector<16x16xf32>, vector<16x16xf32>, vector<16x16xf32>, vector<16x16xf32>, vector<16x16xf32>, vector<16x16xf32>, vector<16x16xf32>, vector<16x16xf32> -> vector<16x128xf32>
    %c3_18 = arith.constant 3 : index
    %c0_19 = arith.constant 0 : index
    %25 = vector.load %arg2[%c3_18, %c0_19] : memref<36x128xf32, #tpu.memory_space<vmem>>, vector<1x128xf32>
    %26 = vector.broadcast %25 : vector<1x128xf32> to vector<16x128xf32>
    %27 = arith.mulf %26, %24 : vector<16x128xf32>
    %28 = arith.addf %21, %27 : vector<16x128xf32>
    %c0_20 = arith.constant 0 : index
    %c0_21 = arith.constant 0 : index
    %c0_22 = arith.constant 0 : index
    %c1_23 = arith.constant 1 : index
    %29 = vector.load %arg1[%c0_20, %c0_21, %c0_22, %c1_23] : memref<1x4x18x18xf32, #tpu.memory_space<vmem>>, vector<1x1x16x16xf32>
    %30 = vector.shape_cast %29 : vector<1x1x16x16xf32> to vector<16x16xf32>
    %31 = tpu.concatenate %30, %30, %30, %30, %30, %30, %30, %30 in 1 : vector<16x16xf32>, vector<16x16xf32>, vector<16x16xf32>, vector<16x16xf32>, vector<16x16xf32>, vector<16x16xf32>, vector<16x16xf32>, vector<16x16xf32> -> vector<16x128xf32>
    %c4 = arith.constant 4 : index
    %c0_24 = arith.constant 0 : index
    %32 = vector.load %arg2[%c4, %c0_24] : memref<36x128xf32, #tpu.memory_space<vmem>>, vector<1x128xf32>
    %33 = vector.broadcast %32 : vector<1x128xf32> to vector<16x128xf32>
    %34 = arith.mulf %33, %31 : vector<16x128xf32>
    %35 = arith.addf %28, %34 : vector<16x128xf32>
    %c0_25 = arith.constant 0 : index
    %c1_26 = arith.constant 1 : index
    %c0_27 = arith.constant 0 : index
    %c1_28 = arith.constant 1 : index
    %36 = vector.load %arg1[%c0_25, %c1_26, %c0_27, %c1_28] : memref<1x4x18x18xf32, #tpu.memory_space<vmem>>, vector<1x1x16x16xf32>
    %37 = vector.shape_cast %36 : vector<1x1x16x16xf32> to vector<16x16xf32>
    %38 = tpu.concatenate %37, %37, %37, %37, %37, %37, %37, %37 in 1 : vector<16x16xf32>, vector<16x16xf32>, vector<16x16xf32>, vector<16x16xf32>, vector<16x16xf32>, vector<16x16xf32>, vector<16x16xf32>, vector<16x16xf32> -> vector<16x128xf32>
    %c5 = arith.constant 5 : index
    %c0_29 = arith.constant 0 : index
    %39 = vector.load %arg2[%c5, %c0_29] : memref<36x128xf32, #tpu.memory_space<vmem>>, vector<1x128xf32>
    %40 = vector.broadcast %39 : vector<1x128xf32> to vector<16x128xf32>
    %41 = arith.mulf %40, %38 : vector<16x128xf32>
    %42 = arith.addf %35, %41 : vector<16x128xf32>
    %c0_30 = arith.constant 0 : index
    %c2_31 = arith.constant 2 : index
    %c0_32 = arith.constant 0 : index
    %c1_33 = arith.constant 1 : index
    %43 = vector.load %arg1[%c0_30, %c2_31, %c0_32, %c1_33] : memref<1x4x18x18xf32, #tpu.memory_space<vmem>>, vector<1x1x16x16xf32>
    %44 = vector.shape_cast %43 : vector<1x1x16x16xf32> to vector<16x16xf32>
    %45 = tpu.concatenate %44, %44, %44, %44, %44, %44, %44, %44 in 1 : vector<16x16xf32>, vector<16x16xf32>, vector<16x16xf32>, vector<16x16xf32>, vector<16x16xf32>, vector<16x16xf32>, vector<16x16xf32>, vector<16x16xf32> -> vector<16x128xf32>
    %c6 = arith.constant 6 : index
    %c0_34 = arith.constant 0 : index
    %46 = vector.load %arg2[%c6, %c0_34] : memref<36x128xf32, #tpu.memory_space<vmem>>, vector<1x128xf32>
    %47 = vector.broadcast %46 : vector<1x128xf32> to vector<16x128xf32>
    %48 = arith.mulf %47, %45 : vector<16x128xf32>
    %49 = arith.addf %42, %48 : vector<16x128xf32>
    %c0_35 = arith.constant 0 : index
    %c3_36 = arith.constant 3 : index
    %c0_37 = arith.constant 0 : index
    %c1_38 = arith.constant 1 : index
    %50 = vector.load %arg1[%c0_35, %c3_36, %c0_37, %c1_38] : memref<1x4x18x18xf32, #tpu.memory_space<vmem>>, vector<1x1x16x16xf32>
    %51 = vector.shape_cast %50 : vector<1x1x16x16xf32> to vector<16x16xf32>
    %52 = tpu.concatenate %51, %51, %51, %51, %51, %51, %51, %51 in 1 : vector<16x16xf32>, vector<16x16xf32>, vector<16x16xf32>, vector<16x16xf32>, vector<16x16xf32>, vector<16x16xf32>, vector<16x16xf32>, vector<16x16xf32> -> vector<16x128xf32>
    %c7 = arith.constant 7 : index
    %c0_39 = arith.constant 0 : index
    %53 = vector.load %arg2[%c7, %c0_39] : memref<36x128xf32, #tpu.memory_space<vmem>>, vector<1x128xf32>
    %54 = vector.broadcast %53 : vector<1x128xf32> to vector<16x128xf32>
    %55 = arith.mulf %54, %52 : vector<16x128xf32>
    %56 = arith.addf %49, %55 : vector<16x128xf32>
    %c0_40 = arith.constant 0 : index
    %c0_41 = arith.constant 0 : index
    %c0_42 = arith.constant 0 : index
    %c2_43 = arith.constant 2 : index
    %57 = vector.load %arg1[%c0_40, %c0_41, %c0_42, %c2_43] : memref<1x4x18x18xf32, #tpu.memory_space<vmem>>, vector<1x1x16x16xf32>
    %58 = vector.shape_cast %57 : vector<1x1x16x16xf32> to vector<16x16xf32>
    %59 = tpu.concatenate %58, %58, %58, %58, %58, %58, %58, %58 in 1 : vector<16x16xf32>, vector<16x16xf32>, vector<16x16xf32>, vector<16x16xf32>, vector<16x16xf32>, vector<16x16xf32>, vector<16x16xf32>, vector<16x16xf32> -> vector<16x128xf32>
    %c8 = arith.constant 8 : index
    %c0_44 = arith.constant 0 : index
    %60 = vector.load %arg2[%c8, %c0_44] : memref<36x128xf32, #tpu.memory_space<vmem>>, vector<1x128xf32>
    %61 = vector.broadcast %60 : vector<1x128xf32> to vector<16x128xf32>
    %62 = arith.mulf %61, %59 : vector<16x128xf32>
    %63 = arith.addf %56, %62 : vector<16x128xf32>
    %c0_45 = arith.constant 0 : index
    %c1_46 = arith.constant 1 : index
    %c0_47 = arith.constant 0 : index
    %c2_48 = arith.constant 2 : index
    %64 = vector.load %arg1[%c0_45, %c1_46, %c0_47, %c2_48] : memref<1x4x18x18xf32, #tpu.memory_space<vmem>>, vector<1x1x16x16xf32>
    %65 = vector.shape_cast %64 : vector<1x1x16x16xf32> to vector<16x16xf32>
    %66 = tpu.concatenate %65, %65, %65, %65, %65, %65, %65, %65 in 1 : vector<16x16xf32>, vector<16x16xf32>, vector<16x16xf32>, vector<16x16xf32>, vector<16x16xf32>, vector<16x16xf32>, vector<16x16xf32>, vector<16x16xf32> -> vector<16x128xf32>
    %c9 = arith.constant 9 : index
    %c0_49 = arith.constant 0 : index
    %67 = vector.load %arg2[%c9, %c0_49] : memref<36x128xf32, #tpu.memory_space<vmem>>, vector<1x128xf32>
    %68 = vector.broadcast %67 : vector<1x128xf32> to vector<16x128xf32>
    %69 = arith.mulf %68, %66 : vector<16x128xf32>
    %70 = arith.addf %63, %69 : vector<16x128xf32>
    %c0_50 = arith.constant 0 : index
    %c2_51 = arith.constant 2 : index
    %c0_52 = arith.constant 0 : index
    %c2_53 = arith.constant 2 : index
    %71 = vector.load %arg1[%c0_50, %c2_51, %c0_52, %c2_53] : memref<1x4x18x18xf32, #tpu.memory_space<vmem>>, vector<1x1x16x16xf32>
    %72 = vector.shape_cast %71 : vector<1x1x16x16xf32> to vector<16x16xf32>
    %73 = tpu.concatenate %72, %72, %72, %72, %72, %72, %72, %72 in 1 : vector<16x16xf32>, vector<16x16xf32>, vector<16x16xf32>, vector<16x16xf32>, vector<16x16xf32>, vector<16x16xf32>, vector<16x16xf32>, vector<16x16xf32> -> vector<16x128xf32>
    %c10 = arith.constant 10 : index
    %c0_54 = arith.constant 0 : index
    %74 = vector.load %arg2[%c10, %c0_54] : memref<36x128xf32, #tpu.memory_space<vmem>>, vector<1x128xf32>
    %75 = vector.broadcast %74 : vector<1x128xf32> to vector<16x128xf32>
    %76 = arith.mulf %75, %73 : vector<16x128xf32>
    %77 = arith.addf %70, %76 : vector<16x128xf32>
    %c0_55 = arith.constant 0 : index
    %c3_56 = arith.constant 3 : index
    %c0_57 = arith.constant 0 : index
    %c2_58 = arith.constant 2 : index
    %78 = vector.load %arg1[%c0_55, %c3_56, %c0_57, %c2_58] : memref<1x4x18x18xf32, #tpu.memory_space<vmem>>, vector<1x1x16x16xf32>
    %79 = vector.shape_cast %78 : vector<1x1x16x16xf32> to vector<16x16xf32>
    %80 = tpu.concatenate %79, %79, %79, %79, %79, %79, %79, %79 in 1 : vector<16x16xf32>, vector<16x16xf32>, vector<16x16xf32>, vector<16x16xf32>, vector<16x16xf32>, vector<16x16xf32>, vector<16x16xf32>, vector<16x16xf32> -> vector<16x128xf32>
    %c11 = arith.constant 11 : index
    %c0_59 = arith.constant 0 : index
    %81 = vector.load %arg2[%c11, %c0_59] : memref<36x128xf32, #tpu.memory_space<vmem>>, vector<1x128xf32>
    %82 = vector.broadcast %81 : vector<1x128xf32> to vector<16x128xf32>
    %83 = arith.mulf %82, %80 : vector<16x128xf32>
    %84 = arith.addf %77, %83 : vector<16x128xf32>
    %c0_60 = arith.constant 0 : index
    %c0_61 = arith.constant 0 : index
    %c1_62 = arith.constant 1 : index
    %c0_63 = arith.constant 0 : index
    %85 = vector.load %arg1[%c0_60, %c0_61, %c1_62, %c0_63] : memref<1x4x18x18xf32, #tpu.memory_space<vmem>>, vector<1x1x16x16xf32>
    %86 = vector.shape_cast %85 : vector<1x1x16x16xf32> to vector<16x16xf32>
    %87 = tpu.concatenate %86, %86, %86, %86, %86, %86, %86, %86 in 1 : vector<16x16xf32>, vector<16x16xf32>, vector<16x16xf32>, vector<16x16xf32>, vector<16x16xf32>, vector<16x16xf32>, vector<16x16xf32>, vector<16x16xf32> -> vector<16x128xf32>
    %c12 = arith.constant 12 : index
    %c0_64 = arith.constant 0 : index
    %88 = vector.load %arg2[%c12, %c0_64] : memref<36x128xf32, #tpu.memory_space<vmem>>, vector<1x128xf32>
    %89 = vector.broadcast %88 : vector<1x128xf32> to vector<16x128xf32>
    %90 = arith.mulf %89, %87 : vector<16x128xf32>
    %91 = arith.addf %84, %90 : vector<16x128xf32>
    %c0_65 = arith.constant 0 : index
    %c1_66 = arith.constant 1 : index
    %c1_67 = arith.constant 1 : index
    %c0_68 = arith.constant 0 : index
    %92 = vector.load %arg1[%c0_65, %c1_66, %c1_67, %c0_68] : memref<1x4x18x18xf32, #tpu.memory_space<vmem>>, vector<1x1x16x16xf32>
    %93 = vector.shape_cast %92 : vector<1x1x16x16xf32> to vector<16x16xf32>
    %94 = tpu.concatenate %93, %93, %93, %93, %93, %93, %93, %93 in 1 : vector<16x16xf32>, vector<16x16xf32>, vector<16x16xf32>, vector<16x16xf32>, vector<16x16xf32>, vector<16x16xf32>, vector<16x16xf32>, vector<16x16xf32> -> vector<16x128xf32>
    %c13 = arith.constant 13 : index
    %c0_69 = arith.constant 0 : index
    %95 = vector.load %arg2[%c13, %c0_69] : memref<36x128xf32, #tpu.memory_space<vmem>>, vector<1x128xf32>
    %96 = vector.broadcast %95 : vector<1x128xf32> to vector<16x128xf32>
    %97 = arith.mulf %96, %94 : vector<16x128xf32>
    %98 = arith.addf %91, %97 : vector<16x128xf32>
    %c0_70 = arith.constant 0 : index
    %c2_71 = arith.constant 2 : index
    %c1_72 = arith.constant 1 : index
    %c0_73 = arith.constant 0 : index
    %99 = vector.load %arg1[%c0_70, %c2_71, %c1_72, %c0_73] : memref<1x4x18x18xf32, #tpu.memory_space<vmem>>, vector<1x1x16x16xf32>
    %100 = vector.shape_cast %99 : vector<1x1x16x16xf32> to vector<16x16xf32>
    %101 = tpu.concatenate %100, %100, %100, %100, %100, %100, %100, %100 in 1 : vector<16x16xf32>, vector<16x16xf32>, vector<16x16xf32>, vector<16x16xf32>, vector<16x16xf32>, vector<16x16xf32>, vector<16x16xf32>, vector<16x16xf32> -> vector<16x128xf32>
    %c14 = arith.constant 14 : index
    %c0_74 = arith.constant 0 : index
    %102 = vector.load %arg2[%c14, %c0_74] : memref<36x128xf32, #tpu.memory_space<vmem>>, vector<1x128xf32>
    %103 = vector.broadcast %102 : vector<1x128xf32> to vector<16x128xf32>
    %104 = arith.mulf %103, %101 : vector<16x128xf32>
    %105 = arith.addf %98, %104 : vector<16x128xf32>
    %c0_75 = arith.constant 0 : index
    %c3_76 = arith.constant 3 : index
    %c1_77 = arith.constant 1 : index
    %c0_78 = arith.constant 0 : index
    %106 = vector.load %arg1[%c0_75, %c3_76, %c1_77, %c0_78] : memref<1x4x18x18xf32, #tpu.memory_space<vmem>>, vector<1x1x16x16xf32>
    %107 = vector.shape_cast %106 : vector<1x1x16x16xf32> to vector<16x16xf32>
    %108 = tpu.concatenate %107, %107, %107, %107, %107, %107, %107, %107 in 1 : vector<16x16xf32>, vector<16x16xf32>, vector<16x16xf32>, vector<16x16xf32>, vector<16x16xf32>, vector<16x16xf32>, vector<16x16xf32>, vector<16x16xf32> -> vector<16x128xf32>
    %c15 = arith.constant 15 : index
    %c0_79 = arith.constant 0 : index
    %109 = vector.load %arg2[%c15, %c0_79] : memref<36x128xf32, #tpu.memory_space<vmem>>, vector<1x128xf32>
    %110 = vector.broadcast %109 : vector<1x128xf32> to vector<16x128xf32>
    %111 = arith.mulf %110, %108 : vector<16x128xf32>
    %112 = arith.addf %105, %111 : vector<16x128xf32>
    %c0_80 = arith.constant 0 : index
    %c0_81 = arith.constant 0 : index
    %c1_82 = arith.constant 1 : index
    %c1_83 = arith.constant 1 : index
    %113 = vector.load %arg1[%c0_80, %c0_81, %c1_82, %c1_83] : memref<1x4x18x18xf32, #tpu.memory_space<vmem>>, vector<1x1x16x16xf32>
    %114 = vector.shape_cast %113 : vector<1x1x16x16xf32> to vector<16x16xf32>
    %115 = tpu.concatenate %114, %114, %114, %114, %114, %114, %114, %114 in 1 : vector<16x16xf32>, vector<16x16xf32>, vector<16x16xf32>, vector<16x16xf32>, vector<16x16xf32>, vector<16x16xf32>, vector<16x16xf32>, vector<16x16xf32> -> vector<16x128xf32>
    %c16 = arith.constant 16 : index
    %c0_84 = arith.constant 0 : index
    %116 = vector.load %arg2[%c16, %c0_84] : memref<36x128xf32, #tpu.memory_space<vmem>>, vector<1x128xf32>
    %117 = vector.broadcast %116 : vector<1x128xf32> to vector<16x128xf32>
    %118 = arith.mulf %117, %115 : vector<16x128xf32>
    %119 = arith.addf %112, %118 : vector<16x128xf32>
    %c0_85 = arith.constant 0 : index
    %c1_86 = arith.constant 1 : index
    %c1_87 = arith.constant 1 : index
    %c1_88 = arith.constant 1 : index
    %120 = vector.load %arg1[%c0_85, %c1_86, %c1_87, %c1_88] : memref<1x4x18x18xf32, #tpu.memory_space<vmem>>, vector<1x1x16x16xf32>
    %121 = vector.shape_cast %120 : vector<1x1x16x16xf32> to vector<16x16xf32>
    %122 = tpu.concatenate %121, %121, %121, %121, %121, %121, %121, %121 in 1 : vector<16x16xf32>, vector<16x16xf32>, vector<16x16xf32>, vector<16x16xf32>, vector<16x16xf32>, vector<16x16xf32>, vector<16x16xf32>, vector<16x16xf32> -> vector<16x128xf32>
    %c17 = arith.constant 17 : index
    %c0_89 = arith.constant 0 : index
    %123 = vector.load %arg2[%c17, %c0_89] : memref<36x128xf32, #tpu.memory_space<vmem>>, vector<1x128xf32>
    %124 = vector.broadcast %123 : vector<1x128xf32> to vector<16x128xf32>
    %125 = arith.mulf %124, %122 : vector<16x128xf32>
    %126 = arith.addf %119, %125 : vector<16x128xf32>
    %c0_90 = arith.constant 0 : index
    %c2_91 = arith.constant 2 : index
    %c1_92 = arith.constant 1 : index
    %c1_93 = arith.constant 1 : index
    %127 = vector.load %arg1[%c0_90, %c2_91, %c1_92, %c1_93] : memref<1x4x18x18xf32, #tpu.memory_space<vmem>>, vector<1x1x16x16xf32>
    %128 = vector.shape_cast %127 : vector<1x1x16x16xf32> to vector<16x16xf32>
    %129 = tpu.concatenate %128, %128, %128, %128, %128, %128, %128, %128 in 1 : vector<16x16xf32>, vector<16x16xf32>, vector<16x16xf32>, vector<16x16xf32>, vector<16x16xf32>, vector<16x16xf32>, vector<16x16xf32>, vector<16x16xf32> -> vector<16x128xf32>
    %c18 = arith.constant 18 : index
    %c0_94 = arith.constant 0 : index
    %130 = vector.load %arg2[%c18, %c0_94] : memref<36x128xf32, #tpu.memory_space<vmem>>, vector<1x128xf32>
    %131 = vector.broadcast %130 : vector<1x128xf32> to vector<16x128xf32>
    %132 = arith.mulf %131, %129 : vector<16x128xf32>
    %133 = arith.addf %126, %132 : vector<16x128xf32>
    %c0_95 = arith.constant 0 : index
    %c3_96 = arith.constant 3 : index
    %c1_97 = arith.constant 1 : index
    %c1_98 = arith.constant 1 : index
    %134 = vector.load %arg1[%c0_95, %c3_96, %c1_97, %c1_98] : memref<1x4x18x18xf32, #tpu.memory_space<vmem>>, vector<1x1x16x16xf32>
    %135 = vector.shape_cast %134 : vector<1x1x16x16xf32> to vector<16x16xf32>
    %136 = tpu.concatenate %135, %135, %135, %135, %135, %135, %135, %135 in 1 : vector<16x16xf32>, vector<16x16xf32>, vector<16x16xf32>, vector<16x16xf32>, vector<16x16xf32>, vector<16x16xf32>, vector<16x16xf32>, vector<16x16xf32> -> vector<16x128xf32>
    %c19 = arith.constant 19 : index
    %c0_99 = arith.constant 0 : index
    %137 = vector.load %arg2[%c19, %c0_99] : memref<36x128xf32, #tpu.memory_space<vmem>>, vector<1x128xf32>
    %138 = vector.broadcast %137 : vector<1x128xf32> to vector<16x128xf32>
    %139 = arith.mulf %138, %136 : vector<16x128xf32>
    %140 = arith.addf %133, %139 : vector<16x128xf32>
    %c0_100 = arith.constant 0 : index
    %c0_101 = arith.constant 0 : index
    %c1_102 = arith.constant 1 : index
    %c2_103 = arith.constant 2 : index
    %141 = vector.load %arg1[%c0_100, %c0_101, %c1_102, %c2_103] : memref<1x4x18x18xf32, #tpu.memory_space<vmem>>, vector<1x1x16x16xf32>
    %142 = vector.shape_cast %141 : vector<1x1x16x16xf32> to vector<16x16xf32>
    %143 = tpu.concatenate %142, %142, %142, %142, %142, %142, %142, %142 in 1 : vector<16x16xf32>, vector<16x16xf32>, vector<16x16xf32>, vector<16x16xf32>, vector<16x16xf32>, vector<16x16xf32>, vector<16x16xf32>, vector<16x16xf32> -> vector<16x128xf32>
    %c20 = arith.constant 20 : index
    %c0_104 = arith.constant 0 : index
    %144 = vector.load %arg2[%c20, %c0_104] : memref<36x128xf32, #tpu.memory_space<vmem>>, vector<1x128xf32>
    %145 = vector.broadcast %144 : vector<1x128xf32> to vector<16x128xf32>
    %146 = arith.mulf %145, %143 : vector<16x128xf32>
    %147 = arith.addf %140, %146 : vector<16x128xf32>
    %c0_105 = arith.constant 0 : index
    %c1_106 = arith.constant 1 : index
    %c1_107 = arith.constant 1 : index
    %c2_108 = arith.constant 2 : index
    %148 = vector.load %arg1[%c0_105, %c1_106, %c1_107, %c2_108] : memref<1x4x18x18xf32, #tpu.memory_space<vmem>>, vector<1x1x16x16xf32>
    %149 = vector.shape_cast %148 : vector<1x1x16x16xf32> to vector<16x16xf32>
    %150 = tpu.concatenate %149, %149, %149, %149, %149, %149, %149, %149 in 1 : vector<16x16xf32>, vector<16x16xf32>, vector<16x16xf32>, vector<16x16xf32>, vector<16x16xf32>, vector<16x16xf32>, vector<16x16xf32>, vector<16x16xf32> -> vector<16x128xf32>
    %c21 = arith.constant 21 : index
    %c0_109 = arith.constant 0 : index
    %151 = vector.load %arg2[%c21, %c0_109] : memref<36x128xf32, #tpu.memory_space<vmem>>, vector<1x128xf32>
    %152 = vector.broadcast %151 : vector<1x128xf32> to vector<16x128xf32>
    %153 = arith.mulf %152, %150 : vector<16x128xf32>
    %154 = arith.addf %147, %153 : vector<16x128xf32>
    %c0_110 = arith.constant 0 : index
    %c2_111 = arith.constant 2 : index
    %c1_112 = arith.constant 1 : index
    %c2_113 = arith.constant 2 : index
    %155 = vector.load %arg1[%c0_110, %c2_111, %c1_112, %c2_113] : memref<1x4x18x18xf32, #tpu.memory_space<vmem>>, vector<1x1x16x16xf32>
    %156 = vector.shape_cast %155 : vector<1x1x16x16xf32> to vector<16x16xf32>
    %157 = tpu.concatenate %156, %156, %156, %156, %156, %156, %156, %156 in 1 : vector<16x16xf32>, vector<16x16xf32>, vector<16x16xf32>, vector<16x16xf32>, vector<16x16xf32>, vector<16x16xf32>, vector<16x16xf32>, vector<16x16xf32> -> vector<16x128xf32>
    %c22 = arith.constant 22 : index
    %c0_114 = arith.constant 0 : index
    %158 = vector.load %arg2[%c22, %c0_114] : memref<36x128xf32, #tpu.memory_space<vmem>>, vector<1x128xf32>
    %159 = vector.broadcast %158 : vector<1x128xf32> to vector<16x128xf32>
    %160 = arith.mulf %159, %157 : vector<16x128xf32>
    %161 = arith.addf %154, %160 : vector<16x128xf32>
    %c0_115 = arith.constant 0 : index
    %c3_116 = arith.constant 3 : index
    %c1_117 = arith.constant 1 : index
    %c2_118 = arith.constant 2 : index
    %162 = vector.load %arg1[%c0_115, %c3_116, %c1_117, %c2_118] : memref<1x4x18x18xf32, #tpu.memory_space<vmem>>, vector<1x1x16x16xf32>
    %163 = vector.shape_cast %162 : vector<1x1x16x16xf32> to vector<16x16xf32>
    %164 = tpu.concatenate %163, %163, %163, %163, %163, %163, %163, %163 in 1 : vector<16x16xf32>, vector<16x16xf32>, vector<16x16xf32>, vector<16x16xf32>, vector<16x16xf32>, vector<16x16xf32>, vector<16x16xf32>, vector<16x16xf32> -> vector<16x128xf32>
    %c23 = arith.constant 23 : index
    %c0_119 = arith.constant 0 : index
    %165 = vector.load %arg2[%c23, %c0_119] : memref<36x128xf32, #tpu.memory_space<vmem>>, vector<1x128xf32>
    %166 = vector.broadcast %165 : vector<1x128xf32> to vector<16x128xf32>
    %167 = arith.mulf %166, %164 : vector<16x128xf32>
    %168 = arith.addf %161, %167 : vector<16x128xf32>
    %c0_120 = arith.constant 0 : index
    %c0_121 = arith.constant 0 : index
    %c2_122 = arith.constant 2 : index
    %c0_123 = arith.constant 0 : index
    %169 = vector.load %arg1[%c0_120, %c0_121, %c2_122, %c0_123] : memref<1x4x18x18xf32, #tpu.memory_space<vmem>>, vector<1x1x16x16xf32>
    %170 = vector.shape_cast %169 : vector<1x1x16x16xf32> to vector<16x16xf32>
    %171 = tpu.concatenate %170, %170, %170, %170, %170, %170, %170, %170 in 1 : vector<16x16xf32>, vector<16x16xf32>, vector<16x16xf32>, vector<16x16xf32>, vector<16x16xf32>, vector<16x16xf32>, vector<16x16xf32>, vector<16x16xf32> -> vector<16x128xf32>
    %c24 = arith.constant 24 : index
    %c0_124 = arith.constant 0 : index
    %172 = vector.load %arg2[%c24, %c0_124] : memref<36x128xf32, #tpu.memory_space<vmem>>, vector<1x128xf32>
    %173 = vector.broadcast %172 : vector<1x128xf32> to vector<16x128xf32>
    %174 = arith.mulf %173, %171 : vector<16x128xf32>
    %175 = arith.addf %168, %174 : vector<16x128xf32>
    %c0_125 = arith.constant 0 : index
    %c1_126 = arith.constant 1 : index
    %c2_127 = arith.constant 2 : index
    %c0_128 = arith.constant 0 : index
    %176 = vector.load %arg1[%c0_125, %c1_126, %c2_127, %c0_128] : memref<1x4x18x18xf32, #tpu.memory_space<vmem>>, vector<1x1x16x16xf32>
    %177 = vector.shape_cast %176 : vector<1x1x16x16xf32> to vector<16x16xf32>
    %178 = tpu.concatenate %177, %177, %177, %177, %177, %177, %177, %177 in 1 : vector<16x16xf32>, vector<16x16xf32>, vector<16x16xf32>, vector<16x16xf32>, vector<16x16xf32>, vector<16x16xf32>, vector<16x16xf32>, vector<16x16xf32> -> vector<16x128xf32>
    %c25 = arith.constant 25 : index
    %c0_129 = arith.constant 0 : index
    %179 = vector.load %arg2[%c25, %c0_129] : memref<36x128xf32, #tpu.memory_space<vmem>>, vector<1x128xf32>
    %180 = vector.broadcast %179 : vector<1x128xf32> to vector<16x128xf32>
    %181 = arith.mulf %180, %178 : vector<16x128xf32>
    %182 = arith.addf %175, %181 : vector<16x128xf32>
    %c0_130 = arith.constant 0 : index
    %c2_131 = arith.constant 2 : index
    %c2_132 = arith.constant 2 : index
    %c0_133 = arith.constant 0 : index
    %183 = vector.load %arg1[%c0_130, %c2_131, %c2_132, %c0_133] : memref<1x4x18x18xf32, #tpu.memory_space<vmem>>, vector<1x1x16x16xf32>
    %184 = vector.shape_cast %183 : vector<1x1x16x16xf32> to vector<16x16xf32>
    %185 = tpu.concatenate %184, %184, %184, %184, %184, %184, %184, %184 in 1 : vector<16x16xf32>, vector<16x16xf32>, vector<16x16xf32>, vector<16x16xf32>, vector<16x16xf32>, vector<16x16xf32>, vector<16x16xf32>, vector<16x16xf32> -> vector<16x128xf32>
    %c26 = arith.constant 26 : index
    %c0_134 = arith.constant 0 : index
    %186 = vector.load %arg2[%c26, %c0_134] : memref<36x128xf32, #tpu.memory_space<vmem>>, vector<1x128xf32>
    %187 = vector.broadcast %186 : vector<1x128xf32> to vector<16x128xf32>
    %188 = arith.mulf %187, %185 : vector<16x128xf32>
    %189 = arith.addf %182, %188 : vector<16x128xf32>
    %c0_135 = arith.constant 0 : index
    %c3_136 = arith.constant 3 : index
    %c2_137 = arith.constant 2 : index
    %c0_138 = arith.constant 0 : index
    %190 = vector.load %arg1[%c0_135, %c3_136, %c2_137, %c0_138] : memref<1x4x18x18xf32, #tpu.memory_space<vmem>>, vector<1x1x16x16xf32>
    %191 = vector.shape_cast %190 : vector<1x1x16x16xf32> to vector<16x16xf32>
    %192 = tpu.concatenate %191, %191, %191, %191, %191, %191, %191, %191 in 1 : vector<16x16xf32>, vector<16x16xf32>, vector<16x16xf32>, vector<16x16xf32>, vector<16x16xf32>, vector<16x16xf32>, vector<16x16xf32>, vector<16x16xf32> -> vector<16x128xf32>
    %c27 = arith.constant 27 : index
    %c0_139 = arith.constant 0 : index
    %193 = vector.load %arg2[%c27, %c0_139] : memref<36x128xf32, #tpu.memory_space<vmem>>, vector<1x128xf32>
    %194 = vector.broadcast %193 : vector<1x128xf32> to vector<16x128xf32>
    %195 = arith.mulf %194, %192 : vector<16x128xf32>
    %196 = arith.addf %189, %195 : vector<16x128xf32>
    %c0_140 = arith.constant 0 : index
    %c0_141 = arith.constant 0 : index
    %c2_142 = arith.constant 2 : index
    %c1_143 = arith.constant 1 : index
    %197 = vector.load %arg1[%c0_140, %c0_141, %c2_142, %c1_143] : memref<1x4x18x18xf32, #tpu.memory_space<vmem>>, vector<1x1x16x16xf32>
    %198 = vector.shape_cast %197 : vector<1x1x16x16xf32> to vector<16x16xf32>
    %199 = tpu.concatenate %198, %198, %198, %198, %198, %198, %198, %198 in 1 : vector<16x16xf32>, vector<16x16xf32>, vector<16x16xf32>, vector<16x16xf32>, vector<16x16xf32>, vector<16x16xf32>, vector<16x16xf32>, vector<16x16xf32> -> vector<16x128xf32>
    %c28 = arith.constant 28 : index
    %c0_144 = arith.constant 0 : index
    %200 = vector.load %arg2[%c28, %c0_144] : memref<36x128xf32, #tpu.memory_space<vmem>>, vector<1x128xf32>
    %201 = vector.broadcast %200 : vector<1x128xf32> to vector<16x128xf32>
    %202 = arith.mulf %201, %199 : vector<16x128xf32>
    %203 = arith.addf %196, %202 : vector<16x128xf32>
    %c0_145 = arith.constant 0 : index
    %c1_146 = arith.constant 1 : index
    %c2_147 = arith.constant 2 : index
    %c1_148 = arith.constant 1 : index
    %204 = vector.load %arg1[%c0_145, %c1_146, %c2_147, %c1_148] : memref<1x4x18x18xf32, #tpu.memory_space<vmem>>, vector<1x1x16x16xf32>
    %205 = vector.shape_cast %204 : vector<1x1x16x16xf32> to vector<16x16xf32>
    %206 = tpu.concatenate %205, %205, %205, %205, %205, %205, %205, %205 in 1 : vector<16x16xf32>, vector<16x16xf32>, vector<16x16xf32>, vector<16x16xf32>, vector<16x16xf32>, vector<16x16xf32>, vector<16x16xf32>, vector<16x16xf32> -> vector<16x128xf32>
    %c29 = arith.constant 29 : index
    %c0_149 = arith.constant 0 : index
    %207 = vector.load %arg2[%c29, %c0_149] : memref<36x128xf32, #tpu.memory_space<vmem>>, vector<1x128xf32>
    %208 = vector.broadcast %207 : vector<1x128xf32> to vector<16x128xf32>
    %209 = arith.mulf %208, %206 : vector<16x128xf32>
    %210 = arith.addf %203, %209 : vector<16x128xf32>
    %c0_150 = arith.constant 0 : index
    %c2_151 = arith.constant 2 : index
    %c2_152 = arith.constant 2 : index
    %c1_153 = arith.constant 1 : index
    %211 = vector.load %arg1[%c0_150, %c2_151, %c2_152, %c1_153] : memref<1x4x18x18xf32, #tpu.memory_space<vmem>>, vector<1x1x16x16xf32>
    %212 = vector.shape_cast %211 : vector<1x1x16x16xf32> to vector<16x16xf32>
    %213 = tpu.concatenate %212, %212, %212, %212, %212, %212, %212, %212 in 1 : vector<16x16xf32>, vector<16x16xf32>, vector<16x16xf32>, vector<16x16xf32>, vector<16x16xf32>, vector<16x16xf32>, vector<16x16xf32>, vector<16x16xf32> -> vector<16x128xf32>
    %c30 = arith.constant 30 : index
    %c0_154 = arith.constant 0 : index
    %214 = vector.load %arg2[%c30, %c0_154] : memref<36x128xf32, #tpu.memory_space<vmem>>, vector<1x128xf32>
    %215 = vector.broadcast %214 : vector<1x128xf32> to vector<16x128xf32>
    %216 = arith.mulf %215, %213 : vector<16x128xf32>
    %217 = arith.addf %210, %216 : vector<16x128xf32>
    %c0_155 = arith.constant 0 : index
    %c3_156 = arith.constant 3 : index
    %c2_157 = arith.constant 2 : index
    %c1_158 = arith.constant 1 : index
    %218 = vector.load %arg1[%c0_155, %c3_156, %c2_157, %c1_158] : memref<1x4x18x18xf32, #tpu.memory_space<vmem>>, vector<1x1x16x16xf32>
    %219 = vector.shape_cast %218 : vector<1x1x16x16xf32> to vector<16x16xf32>
    %220 = tpu.concatenate %219, %219, %219, %219, %219, %219, %219, %219 in 1 : vector<16x16xf32>, vector<16x16xf32>, vector<16x16xf32>, vector<16x16xf32>, vector<16x16xf32>, vector<16x16xf32>, vector<16x16xf32>, vector<16x16xf32> -> vector<16x128xf32>
    %c31 = arith.constant 31 : index
    %c0_159 = arith.constant 0 : index
    %221 = vector.load %arg2[%c31, %c0_159] : memref<36x128xf32, #tpu.memory_space<vmem>>, vector<1x128xf32>
    %222 = vector.broadcast %221 : vector<1x128xf32> to vector<16x128xf32>
    %223 = arith.mulf %222, %220 : vector<16x128xf32>
    %224 = arith.addf %217, %223 : vector<16x128xf32>
    %c0_160 = arith.constant 0 : index
    %c0_161 = arith.constant 0 : index
    %c2_162 = arith.constant 2 : index
    %c2_163 = arith.constant 2 : index
    %225 = vector.load %arg1[%c0_160, %c0_161, %c2_162, %c2_163] : memref<1x4x18x18xf32, #tpu.memory_space<vmem>>, vector<1x1x16x16xf32>
    %226 = vector.shape_cast %225 : vector<1x1x16x16xf32> to vector<16x16xf32>
    %227 = tpu.concatenate %226, %226, %226, %226, %226, %226, %226, %226 in 1 : vector<16x16xf32>, vector<16x16xf32>, vector<16x16xf32>, vector<16x16xf32>, vector<16x16xf32>, vector<16x16xf32>, vector<16x16xf32>, vector<16x16xf32> -> vector<16x128xf32>
    %c32 = arith.constant 32 : index
    %c0_164 = arith.constant 0 : index
    %228 = vector.load %arg2[%c32, %c0_164] : memref<36x128xf32, #tpu.memory_space<vmem>>, vector<1x128xf32>
    %229 = vector.broadcast %228 : vector<1x128xf32> to vector<16x128xf32>
    %230 = arith.mulf %229, %227 : vector<16x128xf32>
    %231 = arith.addf %224, %230 : vector<16x128xf32>
    %c0_165 = arith.constant 0 : index
    %c1_166 = arith.constant 1 : index
    %c2_167 = arith.constant 2 : index
    %c2_168 = arith.constant 2 : index
    %232 = vector.load %arg1[%c0_165, %c1_166, %c2_167, %c2_168] : memref<1x4x18x18xf32, #tpu.memory_space<vmem>>, vector<1x1x16x16xf32>
    %233 = vector.shape_cast %232 : vector<1x1x16x16xf32> to vector<16x16xf32>
    %234 = tpu.concatenate %233, %233, %233, %233, %233, %233, %233, %233 in 1 : vector<16x16xf32>, vector<16x16xf32>, vector<16x16xf32>, vector<16x16xf32>, vector<16x16xf32>, vector<16x16xf32>, vector<16x16xf32>, vector<16x16xf32> -> vector<16x128xf32>
    %c33 = arith.constant 33 : index
    %c0_169 = arith.constant 0 : index
    %235 = vector.load %arg2[%c33, %c0_169] : memref<36x128xf32, #tpu.memory_space<vmem>>, vector<1x128xf32>
    %236 = vector.broadcast %235 : vector<1x128xf32> to vector<16x128xf32>
    %237 = arith.mulf %236, %234 : vector<16x128xf32>
    %238 = arith.addf %231, %237 : vector<16x128xf32>
    %c0_170 = arith.constant 0 : index
    %c2_171 = arith.constant 2 : index
    %c2_172 = arith.constant 2 : index
    %c2_173 = arith.constant 2 : index
    %239 = vector.load %arg1[%c0_170, %c2_171, %c2_172, %c2_173] : memref<1x4x18x18xf32, #tpu.memory_space<vmem>>, vector<1x1x16x16xf32>
    %240 = vector.shape_cast %239 : vector<1x1x16x16xf32> to vector<16x16xf32>
    %241 = tpu.concatenate %240, %240, %240, %240, %240, %240, %240, %240 in 1 : vector<16x16xf32>, vector<16x16xf32>, vector<16x16xf32>, vector<16x16xf32>, vector<16x16xf32>, vector<16x16xf32>, vector<16x16xf32>, vector<16x16xf32> -> vector<16x128xf32>
    %c34 = arith.constant 34 : index
    %c0_174 = arith.constant 0 : index
    %242 = vector.load %arg2[%c34, %c0_174] : memref<36x128xf32, #tpu.memory_space<vmem>>, vector<1x128xf32>
    %243 = vector.broadcast %242 : vector<1x128xf32> to vector<16x128xf32>
    %244 = arith.mulf %243, %241 : vector<16x128xf32>
    %245 = arith.addf %238, %244 : vector<16x128xf32>
    %c0_175 = arith.constant 0 : index
    %c3_176 = arith.constant 3 : index
    %c2_177 = arith.constant 2 : index
    %c2_178 = arith.constant 2 : index
    %246 = vector.load %arg1[%c0_175, %c3_176, %c2_177, %c2_178] : memref<1x4x18x18xf32, #tpu.memory_space<vmem>>, vector<1x1x16x16xf32>
    %247 = vector.shape_cast %246 : vector<1x1x16x16xf32> to vector<16x16xf32>
    %248 = tpu.concatenate %247, %247, %247, %247, %247, %247, %247, %247 in 1 : vector<16x16xf32>, vector<16x16xf32>, vector<16x16xf32>, vector<16x16xf32>, vector<16x16xf32>, vector<16x16xf32>, vector<16x16xf32>, vector<16x16xf32> -> vector<16x128xf32>
    %c35 = arith.constant 35 : index
    %c0_179 = arith.constant 0 : index
    %249 = vector.load %arg2[%c35, %c0_179] : memref<36x128xf32, #tpu.memory_space<vmem>>, vector<1x128xf32>
    %250 = vector.broadcast %249 : vector<1x128xf32> to vector<16x128xf32>
    %251 = arith.mulf %250, %248 : vector<16x128xf32>
    %252 = arith.addf %245, %251 : vector<16x128xf32>
    %cst_180 = arith.constant 0.000000e+00 : f32
    %253 = vector.broadcast %cst_180 : f32 to vector<16x128xf32>
    %254 = arith.maximumf %252, %253 : vector<16x128xf32>
    %c0_181 = arith.constant 0 : index
    %c0_182 = arith.constant 0 : index
    %c0_183 = arith.constant 0 : index
    %255 = vector.load %arg3[%c0_181, %c0_182, %c0_183] : memref<1x16x128xf32, #tpu.memory_space<vmem>>, vector<1x16x128xf32>
    %256 = vector.shape_cast %255 : vector<1x16x128xf32> to vector<16x128xf32>
    %257 = vector.shape_cast %254 : vector<16x128xf32> to vector<1x16x128xf32>
    tpu.vector_store %arg3[%c0_181, %c0_182, %c0_183], %257 {strides = array<i32>} : memref<1x16x128xf32, #tpu.memory_space<vmem>>, vector<1x16x128xf32>,
    return
  }
  func.func @transform_0(%arg0: i32) -> (i32, i32, i32, i32) {
    %c0_i32 = arith.constant 0 : i32
    %c0_i32_0 = arith.constant 0 : i32
    %c0_i32_1 = arith.constant 0 : i32
    %c0_i32_2 = arith.constant 0 : i32
    return %arg0, %c0_i32, %c0_i32_0, %c0_i32_1 : i32, i32, i32, i32
  }
  func.func @transform_1(%arg0: i32) -> (i32, i32) {
    %c0_i32 = arith.constant 0 : i32
    %c0_i32_0 = arith.constant 0 : i32
    %c0_i32_1 = arith.constant 0 : i32
    return %c0_i32, %c0_i32_0 : i32, i32
  }
  func.func @transform_2(%arg0: i32) -> (i32, i32, i32) {
    %c0_i32 = arith.constant 0 : i32
    %c0_i32_0 = arith.constant 0 : i32
    %c0_i32_1 = arith.constant 0 : i32
    return %arg0, %c0_i32, %c0_i32_0 : i32, i32, i32
  }
}

</mosaic_0001>

<llo_original>
// kernel: tpu_custom_call.1
$region0: #{tpu_custom_call.1}
  #allocation0 [shape = 'u32[]', space=smem, size = 0x4, offset = 0x4, fixed_abs, tag = 'smem constant byte address 0x4 - core index']
  #allocation1 [shape = 'u32[144,128]{1,0:T(1,128)}', space=vmem, size = 0x12000, scoped, tag = 'internal scratch']
  %s0 = inlined_call_operand.vmem [shape: f32[2,4,18,18], index: 0, kind: input, shape index: {}]
  %s1 = inlined_call_operand.vmem [shape: f32[36,128], index: 1, kind: input, shape index: {}]
  %s2 = inlined_call_operand.hbm [shape: f32[2,16,128], index: 2, kind: output, shape index: {}]
  %s3 = sld [smem:[#allocation0]]
  $region41: #{tpu_custom_call.1} parent=0
    _
  %s5 = ssub.s32 1, %s3
  %s6 = scalar_select 0, %s5, %s3
  $region1: #{tpu_custom_call.1} parent=0
    #allocation2 [shape = 'u8[16384]{0}', space=vmem, size = 0x4000, scoped, tag = 'output window, operand 0']
    #allocation3 [shape = 's32[2]{0}', space=sflag, size = 0x8, scoped, tag = 'scoped memory for tpu_custom_call.1']
    %7 = vsyncpa [#allocation3], 0
    %s8 = scalar_lea.sflag [#allocation3], 1
    %9 = vsyncpa %s8, 0
    loop: start=0, step=1, limit=4
    $region2: #{tpu_custom_call.1} parent=1 // loop_pre_header
      _
    $region3: #{tpu_custom_call.1} parent=1 // loop_header
      %s11 = sphi 0, %s15
      %p12 = scmp.ge.s32.totalorder %s11, 4
      %s21 = sphi 0, %s23
      %s24 = sphi 0, %s21
      %s25 = sphi 0, %s24
      %s41 = sphi 0, %s25
      %s45 = sphi 0, %s45
      %s47 = sphi 0, %s45
      %s48 = sphi 0, %s47
      %s62 = sphi 0, %s48
      %s68 = sphi 0, %s70
      %s71 = sphi 0, %s68
      %s72 = sphi 0, %s71
      %s88 = sphi 0, %s72
    $region4: #{tpu_custom_call.1} parent=1 // loop_header_branch
      %14 = sbr.rel (%p12) target = $region8
    $region5: #{tpu_custom_call.1} parent=1 // loop_body
      %s16 = ssub.s32 %s11, 1
      %s17 = ssub.s32 %s11, 2
      %s18 = sadd.s32 %s11, 1
      %s19 = ssub.s32 %s11, %s18
      %p20 = scmp.eq.s32.totalorder %s19, 0
      %s22 = sadd.s32 %s21, 1
      %s23 = scalar_select %p20, %s21, %s22
      %p26 = pneg %p20
      %p27 = scmp.eq.s32.totalorder %s11, 1
      %p28 = por %p26, %p27
      %p29 = scmp.ne.s32.totalorder %s21, %s24
      %p30 = scmp.eq.s32.totalorder %s11, 0
      %p31 = por %p29, %p30
      %p32 = scmp.ne.s32.totalorder %s21, %s24
      %p33 = scmp.eq.s32.totalorder %s16, 1
      %p34 = por %p32, %p33
      %p35 = scmp.ne.s32.totalorder %s24, %s25
      %p36 = scmp.eq.s32.totalorder %s16, 0
      %p37 = por %p35, %p36
      %p38 = scmp.ne.s32.totalorder %s24, %s25
      %p39 = scmp.eq.s32.totalorder %s17, 1
      %p40 = por %p38, %p39
      %p42 = scmp.ne.s32.totalorder %s25, %s41
      %p43 = scmp.eq.s32.totalorder %s17, 0
      %p44 = por %p42, %p43
      %s46 = sadd.s32 %s45, 1
      %p49 = scmp.eq.s32.totalorder %s11, 1
      %p50 = scmp.ne.s32.totalorder %s45, %s47
      %p51 = scmp.eq.s32.totalorder %s11, 0
      %p52 = por %p50, %p51
      %p53 = scmp.ne.s32.totalorder %s45, %s47
      %p54 = scmp.eq.s32.totalorder %s16, 1
      %p55 = por %p53, %p54
      %p56 = scmp.ne.s32.totalorder %s47, %s48
      %p57 = scmp.eq.s32.totalorder %s16, 0
      %p58 = por %p56, %p57
      %p59 = scmp.ne.s32.totalorder %s47, %s48
      %p60 = scmp.eq.s32.totalorder %s17, 1
      %p61 = por %p59, %p60
      %p63 = scmp.ne.s32.totalorder %s48, %s62
      %p64 = scmp.eq.s32.totalorder %s17, 0
      %p65 = por %p63, %p64
      %s66 = ssub.s32 %s11, %s18
      %p67 = scmp.eq.s32.totalorder %s66, 0
      %s69 = sadd.s32 %s68, 1
      %s70 = scalar_select %p67, %s68, %s69
      %p73 = pneg %p67
      %p74 = scmp.eq.s32.totalorder %s11, 1
      %p75 = por %p73, %p74
      %p76 = scmp.ne.s32.totalorder %s68, %s71
      %p77 = scmp.eq.s32.totalorder %s11, 0
      %p78 = por %p76, %p77
      %p79 = scmp.ne.s32.totalorder %s68, %s71
      %p80 = scmp.eq.s32.totalorder %s16, 1
      %p81 = por %p79, %p80
      %p82 = scmp.ne.s32.totalorder %s71, %s72
      %p83 = scmp.eq.s32.totalorder %s16, 0
      %p84 = por %p82, %p83
      %p85 = scmp.ne.s32.totalorder %s71, %s72
      %p86 = scmp.eq.s32.totalorder %s17, 1
      %p87 = por %p85, %p86
      %p89 = scmp.ne.s32.totalorder %s72, %s88
      %p90 = scmp.eq.s32.totalorder %s17, 0
      %p91 = por %p89, %p90
      %p92 = scmp.le.s32.totalorder 1, %s11
      %p93 = scmp.lt.s32.totalorder %s11, 3
      %p94 = pnand %p92, %p93
      %p95 = pneg %p94
      // Predicated region
      $region9: #{tpu_custom_call.1} parent=5 // pred_check
        _
      $region10: #{tpu_custom_call.1} parent=5 // pred_check_branch
        %97 = sbr.rel (%p94) target = $region12
      $region11: #{tpu_custom_call.1} parent=5 // pred_region
        %s98 = ssub.s32 %s11, 1
        // Predicated region
        $region13: #{tpu_custom_call.1} parent=11 // pred_check
          %p99 = pneg %p58
        $region14: #{tpu_custom_call.1} parent=11 // pred_check_branch
          %101 = sbr.rel (%p99) target = $region16
        $region15: #{tpu_custom_call.1} parent=11 // pred_region
          _
        $region16: #{tpu_custom_call.1} parent=11 // pred_fallthru
          _
      $region12: #{tpu_custom_call.1} parent=5 // pred_fallthru
        _
      %p102 = scmp.lt.s32.totalorder %s11, 2
      // Predicated region
      $region17: #{tpu_custom_call.1} parent=5 // pred_check
        %p103 = pneg %p102
      $region18: #{tpu_custom_call.1} parent=5 // pred_check_branch
        %105 = sbr.rel (%p103) target = $region20
      $region19: #{tpu_custom_call.1} parent=5 // pred_region
        // Predicated region
        $region21: #{tpu_custom_call.1} parent=19 // pred_check
          %p106 = pneg %p31
        $region22: #{tpu_custom_call.1} parent=19 // pred_check_branch
          %108 = sbr.rel (%p106) target = $region24
        $region23: #{tpu_custom_call.1} parent=19 // pred_region
          %p109 = scmp.lt.s32.totalorder %s11, 1
          %s110 = scalar_select %p109, %s11, 1
          %s111 = smul.addr %s110, 12
          %s112 = smul.addr %s111, 8
          %s113 = scalar_lea.vmem %s0, %s112
        $region24: #{tpu_custom_call.1} parent=19 // pred_fallthru
          _
      $region20: #{tpu_custom_call.1} parent=5 // pred_fallthru
        _
      %p114 = scmp.le.s32.totalorder 1, %s11
      %p115 = scmp.lt.s32.totalorder %s11, 3
      %p116 = pnand %p114, %p115
      %p117 = pneg %p116
      // Predicated region
      $region25: #{tpu_custom_call.1} parent=5 // pred_check
        _
      $region26: #{tpu_custom_call.1} parent=5 // pred_check_branch
        %119 = sbr.rel (%p116) target = $region28
      $region27: #{tpu_custom_call.1} parent=5 // pred_region
        %s120 = ssub.s32 %s11, 1
        %p121 = scmp.lt.s32.totalorder %s16, 1
        %s122 = scalar_select %p121, %s16, 1
        %s123 = smul.addr %s122, 12
        %s124 = smul.addr %s123, 8
        %s125 = scalar_lea.vmem %s0, %s124
        %p126 = pneg %p37
        %p127 = pneg %p34
        %p128 = pneg %p58
        %p129 = pneg %p55
        %p130 = pneg %p84
        %p131 = pneg %p81
        %s132 = sand.u32 %s71, 1
        %s133 = scalar_lea.sflag [#allocation3], %s132
        %s134 = sand.u32 %s71, 1
        %s135 = smul.addr %s134, 16
        %s136 = scalar_lea.vmem [#allocation2], %s135
        %p137 = scmp.lt.s32.totalorder %s16, 1
        %s138 = scalar_select %p137, %s16, 1
        %s139 = smul.addr %s138, 12
        %s140 = smul.addr %s139, 8
        %s141 = scalar_lea.vmem %s0, %s140
        %v142 = vld [vmem:[%s141] sm:$0xff]
        %v143 = vld [vmem:[%s141 + $0x8] sm:$0xff]
        %146 = vrot.lane.b32.xlu0 %v142, 16
        %v147 = vpop.permute.xlu0 %146
        %148 = vrot.lane.b32.xlu0 %v143, 16
        %v149 = vpop.permute.xlu0 %148
        %152 = vrot.lane.b32.xlu0 %v142, 32
        %v153 = vpop.permute.xlu0 %152
        %154 = vrot.lane.b32.xlu0 %v143, 32
        %v155 = vpop.permute.xlu0 %154
        %158 = vrot.lane.b32.xlu0 %v142, 48
        %v159 = vpop.permute.xlu0 %158
        %160 = vrot.lane.b32.xlu0 %v143, 48
        %v161 = vpop.permute.xlu0 %160
        %164 = vrot.lane.b32.xlu0 %v142, 64
        %v165 = vpop.permute.xlu0 %164
        %166 = vrot.lane.b32.xlu0 %v143, 64
        %v167 = vpop.permute.xlu0 %166
        %170 = vrot.lane.b32.xlu0 %v142, 80
        %v171 = vpop.permute.xlu0 %170
        %172 = vrot.lane.b32.xlu0 %v143, 80
        %v173 = vpop.permute.xlu0 %172
        %176 = vrot.lane.b32.xlu0 %v142, 96
        %v177 = vpop.permute.xlu0 %176
        %178 = vrot.lane.b32.xlu0 %v143, 96
        %v179 = vpop.permute.xlu0 %178
        %182 = vrot.lane.b32.xlu0 %v142, 112
        %v183 = vpop.permute.xlu0 %182
        %184 = vrot.lane.b32.xlu0 %v143, 112
        %v185 = vpop.permute.xlu0 %184
        %vm188 = vcmask 130048
        %v189 = vsel %vm188, %v142, %v147
        %v190 = vsel %vm188, %v143, %v149
        %vm191 = vcmask 261120
        %v192 = vsel %vm191, %v189, %v153
        %v193 = vsel %vm191, %v190, %v155
        %vm194 = vcmask 392192
        %v195 = vsel %vm194, %v192, %v159
        %v196 = vsel %vm194, %v193, %v161
        %vm197 = vcmask 523264
        %v198 = vsel %vm197, %v195, %v165
        %v199 = vsel %vm197, %v196, %v167
        %vm200 = vcmask 654336
        %v201 = vsel %vm200, %v198, %v171
        %v202 = vsel %vm200, %v199, %v173
        %vm203 = vcmask 785408
        %v204 = vsel %vm203, %v201, %v177
        %v205 = vsel %vm203, %v202, %v179
        %vm206 = vcmask 916480
        %v207 = vsel %vm206, %v204, %v183
        %v208 = vsel %vm206, %v205, %v185
        %v209 = vld [vmem:[%s1] sm:$0x1]
        %v210 = vlaneseq
        %v211 = vshrl.u32 %v210, 7
        %v212 = vsub.s32 0, %v211
        %v213 = vrot.slane %v209, %v212
        %v214 = vmul.f32 %v213, %v207
        %v215 = vmul.f32 %v213, %v208
        %v216 = vadd.f32 %v214, 0.0
        %v217 = vadd.f32 %v215, 0.0
        %s218 = scalar_lea.vmem %s141, 24
        %v219 = vld [vmem:[%s218] sm:$0xff]
        %v220 = vld [vmem:[%s218 + $0x8] sm:$0xff]
        %223 = vrot.lane.b32.xlu0 %v219, 16
        %v224 = vpop.permute.xlu0 %223
        %225 = vrot.lane.b32.xlu0 %v220, 16
        %v226 = vpop.permute.xlu0 %225
        %229 = vrot.lane.b32.xlu0 %v219, 32
        %v230 = vpop.permute.xlu0 %229
        %231 = vrot.lane.b32.xlu0 %v220, 32
        %v232 = vpop.permute.xlu0 %231
        %235 = vrot.lane.b32.xlu0 %v219, 48
        %v236 = vpop.permute.xlu0 %235
        %237 = vrot.lane.b32.xlu0 %v220, 48
        %v238 = vpop.permute.xlu0 %237
        %241 = vrot.lane.b32.xlu0 %v219, 64
        %v242 = vpop.permute.xlu0 %241
        %243 = vrot.lane.b32.xlu0 %v220, 64
        %v244 = vpop.permute.xlu0 %243
        %247 = vrot.lane.b32.xlu0 %v219, 80
        %v248 = vpop.permute.xlu0 %247
        %249 = vrot.lane.b32.xlu0 %v220, 80
        %v250 = vpop.permute.xlu0 %249
        %253 = vrot.lane.b32.xlu0 %v219, 96
        %v254 = vpop.permute.xlu0 %253
        %255 = vrot.lane.b32.xlu0 %v220, 96
        %v256 = vpop.permute.xlu0 %255
        %259 = vrot.lane.b32.xlu0 %v219, 112
        %v260 = vpop.permute.xlu0 %259
        %261 = vrot.lane.b32.xlu0 %v220, 112
        %v262 = vpop.permute.xlu0 %261
        %v265 = vsel %vm188, %v219, %v224
        %v266 = vsel %vm188, %v220, %v226
        %v267 = vsel %vm191, %v265, %v230
        %v268 = vsel %vm191, %v266, %v232
        %v269 = vsel %vm194, %v267, %v236
        %v270 = vsel %vm194, %v268, %v238
        %v271 = vsel %vm197, %v269, %v242
        %v272 = vsel %vm197, %v270, %v244
        %v273 = vsel %vm200, %v271, %v248
        %v274 = vsel %vm200, %v272, %v250
        %v275 = vsel %vm203, %v273, %v254
        %v276 = vsel %vm203, %v274, %v256
        %v277 = vsel %vm206, %v275, %v260
        %v278 = vsel %vm206, %v276, %v262
        %v279 = vld [vmem:[%s1 + $0x1] sm:$0x1]
        %v280 = vlaneseq
        %v281 = vshrl.u32 %v280, 7
        %v282 = vsub.s32 0, %v281
        %v283 = vrot.slane %v279, %v282
        %v284 = vmul.f32 %v283, %v277
        %v285 = vmul.f32 %v283, %v278
        %v286 = vadd.f32 %v216, %v284
        %v287 = vadd.f32 %v217, %v285
        %s288 = scalar_lea.vmem %s141, 48
        %v289 = vld [vmem:[%s288] sm:$0xff]
        %v290 = vld [vmem:[%s288 + $0x8] sm:$0xff]
        %293 = vrot.lane.b32.xlu0 %v289, 16
        %v294 = vpop.permute.xlu0 %293
        %295 = vrot.lane.b32.xlu0 %v290, 16
        %v296 = vpop.permute.xlu0 %295
        %299 = vrot.lane.b32.xlu0 %v289, 32
        %v300 = vpop.permute.xlu0 %299
        %301 = vrot.lane.b32.xlu0 %v290, 32
        %v302 = vpop.permute.xlu0 %301
        %305 = vrot.lane.b32.xlu0 %v289, 48
        %v306 = vpop.permute.xlu0 %305
        %307 = vrot.lane.b32.xlu0 %v290, 48
        %v308 = vpop.permute.xlu0 %307
        %311 = vrot.lane.b32.xlu0 %v289, 64
        %v312 = vpop.permute.xlu0 %311
        %313 = vrot.lane.b32.xlu0 %v290, 64
        %v314 = vpop.permute.xlu0 %313
        %317 = vrot.lane.b32.xlu0 %v289, 80
        %v318 = vpop.permute.xlu0 %317
        %319 = vrot.lane.b32.xlu0 %v290, 80
        %v320 = vpop.permute.xlu0 %319
        %323 = vrot.lane.b32.xlu0 %v289, 96
        %v324 = vpop.permute.xlu0 %323
        %325 = vrot.lane.b32.xlu0 %v290, 96
        %v326 = vpop.permute.xlu0 %325
        %329 = vrot.lane.b32.xlu0 %v289, 112
        %v330 = vpop.permute.xlu0 %329
        %331 = vrot.lane.b32.xlu0 %v290, 112
        %v332 = vpop.permute.xlu0 %331
        %v335 = vsel %vm188, %v289, %v294
        %v336 = vsel %vm188, %v290, %v296
        %v337 = vsel %vm191, %v335, %v300
        %v338 = vsel %vm191, %v336, %v302
        %v339 = vsel %vm194, %v337, %v306
        %v340 = vsel %vm194, %v338, %v308
        %v341 = vsel %vm197, %v339, %v312
        %v342 = vsel %vm197, %v340, %v314
        %v343 = vsel %vm200, %v341, %v318
        %v344 = vsel %vm200, %v342, %v320
        %v345 = vsel %vm203, %v343, %v324
        %v346 = vsel %vm203, %v344, %v326
        %v347 = vsel %vm206, %v345, %v330
        %v348 = vsel %vm206, %v346, %v332
        %v349 = vld [vmem:[%s1 + $0x2] sm:$0x1]
        %v350 = vlaneseq
        %v351 = vshrl.u32 %v350, 7
        %v352 = vsub.s32 0, %v351
        %v353 = vrot.slane %v349, %v352
        %v354 = vmul.f32 %v353, %v347
        %v355 = vmul.f32 %v353, %v348
        %v356 = vadd.f32 %v286, %v354
        %v357 = vadd.f32 %v287, %v355
        %s358 = scalar_lea.vmem %s141, 72
        %v359 = vld [vmem:[%s358] sm:$0xff]
        %v360 = vld [vmem:[%s358 + $0x8] sm:$0xff]
        %363 = vrot.lane.b32.xlu0 %v359, 16
        %v364 = vpop.permute.xlu0 %363
        %365 = vrot.lane.b32.xlu0 %v360, 16
        %v366 = vpop.permute.xlu0 %365
        %369 = vrot.lane.b32.xlu0 %v359, 32
        %v370 = vpop.permute.xlu0 %369
        %371 = vrot.lane.b32.xlu0 %v360, 32
        %v372 = vpop.permute.xlu0 %371
        %375 = vrot.lane.b32.xlu0 %v359, 48
        %v376 = vpop.permute.xlu0 %375
        %377 = vrot.lane.b32.xlu0 %v360, 48
        %v378 = vpop.permute.xlu0 %377
        %381 = vrot.lane.b32.xlu0 %v359, 64
        %v382 = vpop.permute.xlu0 %381
        %383 = vrot.lane.b32.xlu0 %v360, 64
        %v384 = vpop.permute.xlu0 %383
        %387 = vrot.lane.b32.xlu0 %v359, 80
        %v388 = vpop.permute.xlu0 %387
        %389 = vrot.lane.b32.xlu0 %v360, 80
        %v390 = vpop.permute.xlu0 %389
        %393 = vrot.lane.b32.xlu0 %v359, 96
        %v394 = vpop.permute.xlu0 %393
        %395 = vrot.lane.b32.xlu0 %v360, 96
        %v396 = vpop.permute.xlu0 %395
        %399 = vrot.lane.b32.xlu0 %v359, 112
        %v400 = vpop.permute.xlu0 %399
        %401 = vrot.lane.b32.xlu0 %v360, 112
        %v402 = vpop.permute.xlu0 %401
        %v405 = vsel %vm188, %v359, %v364
        %v406 = vsel %vm188, %v360, %v366
        %v407 = vsel %vm191, %v405, %v370
        %v408 = vsel %vm191, %v406, %v372
        %v409 = vsel %vm194, %v407, %v376
        %v410 = vsel %vm194, %v408, %v378
        %v411 = vsel %vm197, %v409, %v382
        %v412 = vsel %vm197, %v410, %v384
        %v413 = vsel %vm200, %v411, %v388
        %v414 = vsel %vm200, %v412, %v390
        %v415 = vsel %vm203, %v413, %v394
        %v416 = vsel %vm203, %v414, %v396
        %v417 = vsel %vm206, %v415, %v400
        %v418 = vsel %vm206, %v416, %v402
        %v419 = vld [vmem:[%s1 + $0x3] sm:$0x1]
        %v420 = vlaneseq
        %v421 = vshrl.u32 %v420, 7
        %v422 = vsub.s32 0, %v421
        %v423 = vrot.slane %v419, %v422
        %v424 = vmul.f32 %v423, %v417
        %v425 = vmul.f32 %v423, %v418
        %v426 = vadd.f32 %v356, %v424
        %v427 = vadd.f32 %v357, %v425
        %428 = vrot.lane.b32.xlu0 %v142, 127
        %v429 = vpop.permute.xlu0 %428
        %430 = vrot.lane.b32.xlu0 %v143, 127
        %v431 = vpop.permute.xlu0 %430
        %434 = vrot.lane.b32.xlu0 %v142, 15
        %v435 = vpop.permute.xlu0 %434
        %436 = vrot.lane.b32.xlu0 %v143, 15
        %v437 = vpop.permute.xlu0 %436
        %440 = vrot.lane.b32.xlu0 %v142, 31
        %v441 = vpop.permute.xlu0 %440
        %442 = vrot.lane.b32.xlu0 %v143, 31
        %v443 = vpop.permute.xlu0 %442
        %446 = vrot.lane.b32.xlu0 %v142, 47
        %v447 = vpop.permute.xlu0 %446
        %448 = vrot.lane.b32.xlu0 %v143, 47
        %v449 = vpop.permute.xlu0 %448
        %452 = vrot.lane.b32.xlu0 %v142, 63
        %v453 = vpop.permute.xlu0 %452
        %454 = vrot.lane.b32.xlu0 %v143, 63
        %v455 = vpop.permute.xlu0 %454
        %458 = vrot.lane.b32.xlu0 %v142, 79
        %v459 = vpop.permute.xlu0 %458
        %460 = vrot.lane.b32.xlu0 %v143, 79
        %v461 = vpop.permute.xlu0 %460
        %464 = vrot.lane.b32.xlu0 %v142, 95
        %v465 = vpop.permute.xlu0 %464
        %466 = vrot.lane.b32.xlu0 %v143, 95
        %v467 = vpop.permute.xlu0 %466
        %470 = vrot.lane.b32.xlu0 %v142, 111
        %v471 = vpop.permute.xlu0 %470
        %472 = vrot.lane.b32.xlu0 %v143, 111
        %v473 = vpop.permute.xlu0 %472
        %v476 = vsel %vm188, %v429, %v435
        %v477 = vsel %vm188, %v431, %v437
        %v478 = vsel %vm191, %v476, %v441
        %v479 = vsel %vm191, %v477, %v443
        %v480 = vsel %vm194, %v478, %v447
        %v481 = vsel %vm194, %v479, %v449
        %v482 = vsel %vm197, %v480, %v453
        %v483 = vsel %vm197, %v481, %v455
        %v484 = vsel %vm200, %v482, %v459
        %v485 = vsel %vm200, %v483, %v461
        %v486 = vsel %vm203, %v484, %v465
        %v487 = vsel %vm203, %v485, %v467
        %v488 = vsel %vm206, %v486, %v471
        %v489 = vsel %vm206, %v487, %v473
        %v490 = vld [vmem:[%s1 + $0x4] sm:$0x1]
        %v491 = vlaneseq
        %v492 = vshrl.u32 %v491, 7
        %v493 = vsub.s32 0, %v492
        %v494 = vrot.slane %v490, %v493
        %v495 = vmul.f32 %v494, %v488
        %v496 = vmul.f32 %v494, %v489
        %v497 = vadd.f32 %v426, %v495
        %v498 = vadd.f32 %v427, %v496
        %499 = vrot.lane.b32.xlu0 %v219, 127
        %v500 = vpop.permute.xlu0 %499
        %501 = vrot.lane.b32.xlu0 %v220, 127
        %v502 = vpop.permute.xlu0 %501
        %505 = vrot.lane.b32.xlu0 %v219, 15
        %v506 = vpop.permute.xlu0 %505
        %507 = vrot.lane.b32.xlu0 %v220, 15
        %v508 = vpop.permute.xlu0 %507
        %511 = vrot.lane.b32.xlu0 %v219, 31
        %v512 = vpop.permute.xlu0 %511
        %513 = vrot.lane.b32.xlu0 %v220, 31
        %v514 = vpop.permute.xlu0 %513
        %517 = vrot.lane.b32.xlu0 %v219, 47
        %v518 = vpop.permute.xlu0 %517
        %519 = vrot.lane.b32.xlu0 %v220, 47
        %v520 = vpop.permute.xlu0 %519
        %523 = vrot.lane.b32.xlu0 %v219, 63
        %v524 = vpop.permute.xlu0 %523
        %525 = vrot.lane.b32.xlu0 %v220, 63
        %v526 = vpop.permute.xlu0 %525
        %529 = vrot.lane.b32.xlu0 %v219, 79
        %v530 = vpop.permute.xlu0 %529
        %531 = vrot.lane.b32.xlu0 %v220, 79
        %v532 = vpop.permute.xlu0 %531
        %535 = vrot.lane.b32.xlu0 %v219, 95
        %v536 = vpop.permute.xlu0 %535
        %537 = vrot.lane.b32.xlu0 %v220, 95
        %v538 = vpop.permute.xlu0 %537
        %541 = vrot.lane.b32.xlu0 %v219, 111
        %v542 = vpop.permute.xlu0 %541
        %543 = vrot.lane.b32.xlu0 %v220, 111
        %v544 = vpop.permute.xlu0 %543
        %v547 = vsel %vm188, %v500, %v506
        %v548 = vsel %vm188, %v502, %v508
        %v549 = vsel %vm191, %v547, %v512
        %v550 = vsel %vm191, %v548, %v514
        %v551 = vsel %vm194, %v549, %v518
        %v552 = vsel %vm194, %v550, %v520
        %v553 = vsel %vm197, %v551, %v524
        %v554 = vsel %vm197, %v552, %v526
        %v555 = vsel %vm200, %v553, %v530
        %v556 = vsel %vm200, %v554, %v532
        %v557 = vsel %vm203, %v555, %v536
        %v558 = vsel %vm203, %v556, %v538
        %v559 = vsel %vm206, %v557, %v542
        %v560 = vsel %vm206, %v558, %v544
        %v561 = vld [vmem:[%s1 + $0x5] sm:$0x1]
        %v562 = vlaneseq
        %v563 = vshrl.u32 %v562, 7
        %v564 = vsub.s32 0, %v563
        %v565 = vrot.slane %v561, %v564
        %v566 = vmul.f32 %v565, %v559
        %v567 = vmul.f32 %v565, %v560
        %v568 = vadd.f32 %v497, %v566
        %v569 = vadd.f32 %v498, %v567
        %570 = vrot.lane.b32.xlu0 %v289, 127
        %v571 = vpop.permute.xlu0 %570
        %572 = vrot.lane.b32.xlu0 %v290, 127
        %v573 = vpop.permute.xlu0 %572
        %576 = vrot.lane.b32.xlu0 %v289, 15
        %v577 = vpop.permute.xlu0 %576
        %578 = vrot.lane.b32.xlu0 %v290, 15
        %v579 = vpop.permute.xlu0 %578
        %582 = vrot.lane.b32.xlu0 %v289, 31
        %v583 = vpop.permute.xlu0 %582
        %584 = vrot.lane.b32.xlu0 %v290, 31
        %v585 = vpop.permute.xlu0 %584
        %588 = vrot.lane.b32.xlu0 %v289, 47
        %v589 = vpop.permute.xlu0 %588
        %590 = vrot.lane.b32.xlu0 %v290, 47
        %v591 = vpop.permute.xlu0 %590
        %594 = vrot.lane.b32.xlu0 %v289, 63
        %v595 = vpop.permute.xlu0 %594
        %596 = vrot.lane.b32.xlu0 %v290, 63
        %v597 = vpop.permute.xlu0 %596
        %600 = vrot.lane.b32.xlu0 %v289, 79
        %v601 = vpop.permute.xlu0 %600
        %602 = vrot.lane.b32.xlu0 %v290, 79
        %v603 = vpop.permute.xlu0 %602
        %606 = vrot.lane.b32.xlu0 %v289, 95
        %v607 = vpop.permute.xlu0 %606
        %608 = vrot.lane.b32.xlu0 %v290, 95
        %v609 = vpop.permute.xlu0 %608
        %612 = vrot.lane.b32.xlu0 %v289, 111
        %v613 = vpop.permute.xlu0 %612
        %614 = vrot.lane.b32.xlu0 %v290, 111
        %v615 = vpop.permute.xlu0 %614
        %v618 = vsel %vm188, %v571, %v577
        %v619 = vsel %vm188, %v573, %v579
        %v620 = vsel %vm191, %v618, %v583
        %v621 = vsel %vm191, %v619, %v585
        %v622 = vsel %vm194, %v620, %v589
        %v623 = vsel %vm194, %v621, %v591
        %v624 = vsel %vm197, %v622, %v595
        %v625 = vsel %vm197, %v623, %v597
        %v626 = vsel %vm200, %v624, %v601
        %v627 = vsel %vm200, %v625, %v603
        %v628 = vsel %vm203, %v626, %v607
        %v629 = vsel %vm203, %v627, %v609
        %v630 = vsel %vm206, %v628, %v613
        %v631 = vsel %vm206, %v629, %v615
        %v632 = vld [vmem:[%s1 + $0x6] sm:$0x1]
        %v633 = vlaneseq
        %v634 = vshrl.u32 %v633, 7
        %v635 = vsub.s32 0, %v634
        %v636 = vrot.slane %v632, %v635
        %v637 = vmul.f32 %v636, %v630
        %v638 = vmul.f32 %v636, %v631
        %v639 = vadd.f32 %v568, %v637
        %v640 = vadd.f32 %v569, %v638
        %641 = vrot.lane.b32.xlu0 %v359, 127
        %v642 = vpop.permute.xlu0 %641
        %643 = vrot.lane.b32.xlu0 %v360, 127
        %v644 = vpop.permute.xlu0 %643
        %647 = vrot.lane.b32.xlu0 %v359, 15
        %v648 = vpop.permute.xlu0 %647
        %649 = vrot.lane.b32.xlu0 %v360, 15
        %v650 = vpop.permute.xlu0 %649
        %653 = vrot.lane.b32.xlu0 %v359, 31
        %v654 = vpop.permute.xlu0 %653
        %655 = vrot.lane.b32.xlu0 %v360, 31
        %v656 = vpop.permute.xlu0 %655
        %659 = vrot.lane.b32.xlu0 %v359, 47
        %v660 = vpop.permute.xlu0 %659
        %661 = vrot.lane.b32.xlu0 %v360, 47
        %v662 = vpop.permute.xlu0 %661
        %665 = vrot.lane.b32.xlu0 %v359, 63
        %v666 = vpop.permute.xlu0 %665
        %667 = vrot.lane.b32.xlu0 %v360, 63
        %v668 = vpop.permute.xlu0 %667
        %671 = vrot.lane.b32.xlu0 %v359, 79
        %v672 = vpop.permute.xlu0 %671
        %673 = vrot.lane.b32.xlu0 %v360, 79
        %v674 = vpop.permute.xlu0 %673
        %677 = vrot.lane.b32.xlu0 %v359, 95
        %v678 = vpop.permute.xlu0 %677
        %679 = vrot.lane.b32.xlu0 %v360, 95
        %v680 = vpop.permute.xlu0 %679
        %683 = vrot.lane.b32.xlu0 %v359, 111
        %v684 = vpop.permute.xlu0 %683
        %685 = vrot.lane.b32.xlu0 %v360, 111
        %v686 = vpop.permute.xlu0 %685
        %v689 = vsel %vm188, %v642, %v648
        %v690 = vsel %vm188, %v644, %v650
        %v691 = vsel %vm191, %v689, %v654
        %v692 = vsel %vm191, %v690, %v656
        %v693 = vsel %vm194, %v691, %v660
        %v694 = vsel %vm194, %v692, %v662
        %v695 = vsel %vm197, %v693, %v666
        %v696 = vsel %vm197, %v694, %v668
        %v697 = vsel %vm200, %v695, %v672
        %v698 = vsel %vm200, %v696, %v674
        %v699 = vsel %vm203, %v697, %v678
        %v700 = vsel %vm203, %v698, %v680
        %v701 = vsel %vm206, %v699, %v684
        %v702 = vsel %vm206, %v700, %v686
        %v703 = vld [vmem:[%s1 + $0x7] sm:$0x1]
        %v704 = vlaneseq
        %v705 = vshrl.u32 %v704, 7
        %v706 = vsub.s32 0, %v705
        %v707 = vrot.slane %v703, %v706
        %v708 = vmul.f32 %v707, %v701
        %v709 = vmul.f32 %v707, %v702
        %v710 = vadd.f32 %v639, %v708
        %v711 = vadd.f32 %v640, %v709
        %712 = vrot.lane.b32.xlu0 %v142, 126
        %v713 = vpop.permute.xlu0 %712
        %714 = vrot.lane.b32.xlu0 %v143, 126
        %v715 = vpop.permute.xlu0 %714
        %718 = vrot.lane.b32.xlu0 %v142, 14
        %v719 = vpop.permute.xlu0 %718
        %720 = vrot.lane.b32.xlu0 %v143, 14
        %v721 = vpop.permute.xlu0 %720
        %724 = vrot.lane.b32.xlu0 %v142, 30
        %v725 = vpop.permute.xlu0 %724
        %726 = vrot.lane.b32.xlu0 %v143, 30
        %v727 = vpop.permute.xlu0 %726
        %730 = vrot.lane.b32.xlu0 %v142, 46
        %v731 = vpop.permute.xlu0 %730
        %732 = vrot.lane.b32.xlu0 %v143, 46
        %v733 = vpop.permute.xlu0 %732
        %736 = vrot.lane.b32.xlu0 %v142, 62
        %v737 = vpop.permute.xlu0 %736
        %738 = vrot.lane.b32.xlu0 %v143, 62
        %v739 = vpop.permute.xlu0 %738
        %742 = vrot.lane.b32.xlu0 %v142, 78
        %v743 = vpop.permute.xlu0 %742
        %744 = vrot.lane.b32.xlu0 %v143, 78
        %v745 = vpop.permute.xlu0 %744
        %748 = vrot.lane.b32.xlu0 %v142, 94
        %v749 = vpop.permute.xlu0 %748
        %750 = vrot.lane.b32.xlu0 %v143, 94
        %v751 = vpop.permute.xlu0 %750
        %754 = vrot.lane.b32.xlu0 %v142, 110
        %v755 = vpop.permute.xlu0 %754
        %756 = vrot.lane.b32.xlu0 %v143, 110
        %v757 = vpop.permute.xlu0 %756
        %v760 = vsel %vm188, %v713, %v719
        %v761 = vsel %vm188, %v715, %v721
        %v762 = vsel %vm191, %v760, %v725
        %v763 = vsel %vm191, %v761, %v727
        %v764 = vsel %vm194, %v762, %v731
        %v765 = vsel %vm194, %v763, %v733
        %v766 = vsel %vm197, %v764, %v737
        %v767 = vsel %vm197, %v765, %v739
        %v768 = vsel %vm200, %v766, %v743
        %v769 = vsel %vm200, %v767, %v745
        %v770 = vsel %vm203, %v768, %v749
        %v771 = vsel %vm203, %v769, %v751
        %v772 = vsel %vm206, %v770, %v755
        %v773 = vsel %vm206, %v771, %v757
        %v774 = vld [vmem:[%s1 + $0x8] sm:$0x1]
        %v775 = vlaneseq
        %v776 = vshrl.u32 %v775, 7
        %v777 = vsub.s32 0, %v776
        %v778 = vrot.slane %v774, %v777
        %v779 = vmul.f32 %v778, %v772
        %v780 = vmul.f32 %v778, %v773
        %v781 = vadd.f32 %v710, %v779
        %v782 = vadd.f32 %v711, %v780
        %783 = vrot.lane.b32.xlu0 %v219, 126
        %v784 = vpop.permute.xlu0 %783
        %785 = vrot.lane.b32.xlu0 %v220, 126
        %v786 = vpop.permute.xlu0 %785
        %789 = vrot.lane.b32.xlu0 %v219, 14
        %v790 = vpop.permute.xlu0 %789
        %791 = vrot.lane.b32.xlu0 %v220, 14
        %v792 = vpop.permute.xlu0 %791
        %795 = vrot.lane.b32.xlu0 %v219, 30
        %v796 = vpop.permute.xlu0 %795
        %797 = vrot.lane.b32.xlu0 %v220, 30
        %v798 = vpop.permute.xlu0 %797
        %801 = vrot.lane.b32.xlu0 %v219, 46
        %v802 = vpop.permute.xlu0 %801
        %803 = vrot.lane.b32.xlu0 %v220, 46
        %v804 = vpop.permute.xlu0 %803
        %807 = vrot.lane.b32.xlu0 %v219, 62
        %v808 = vpop.permute.xlu0 %807
        %809 = vrot.lane.b32.xlu0 %v220, 62
        %v810 = vpop.permute.xlu0 %809
        %813 = vrot.lane.b32.xlu0 %v219, 78
        %v814 = vpop.permute.xlu0 %813
        %815 = vrot.lane.b32.xlu0 %v220, 78
        %v816 = vpop.permute.xlu0 %815
        %819 = vrot.lane.b32.xlu0 %v219, 94
        %v820 = vpop.permute.xlu0 %819
        %821 = vrot.lane.b32.xlu0 %v220, 94
        %v822 = vpop.permute.xlu0 %821
        %825 = vrot.lane.b32.xlu0 %v219, 110
        %v826 = vpop.permute.xlu0 %825
        %827 = vrot.lane.b32.xlu0 %v220, 110
        %v828 = vpop.permute.xlu0 %827
        %v831 = vsel %vm188, %v784, %v790
        %v832 = vsel %vm188, %v786, %v792
        %v833 = vsel %vm191, %v831, %v796
        %v834 = vsel %vm191, %v832, %v798
        %v835 = vsel %vm194, %v833, %v802
        %v836 = vsel %vm194, %v834, %v804
        %v837 = vsel %vm197, %v835, %v808
        %v838 = vsel %vm197, %v836, %v810
        %v839 = vsel %vm200, %v837, %v814
        %v840 = vsel %vm200, %v838, %v816
        %v841 = vsel %vm203, %v839, %v820
        %v842 = vsel %vm203, %v840, %v822
        %v843 = vsel %vm206, %v841, %v826
        %v844 = vsel %vm206, %v842, %v828
        %v845 = vld [vmem:[%s1 + $0x9] sm:$0x1]
        %v846 = vlaneseq
        %v847 = vshrl.u32 %v846, 7
        %v848 = vsub.s32 0, %v847
        %v849 = vrot.slane %v845, %v848
        %v850 = vmul.f32 %v849, %v843
        %v851 = vmul.f32 %v849, %v844
        %v852 = vadd.f32 %v781, %v850
        %v853 = vadd.f32 %v782, %v851
        %854 = vrot.lane.b32.xlu0 %v289, 126
        %v855 = vpop.permute.xlu0 %854
        %856 = vrot.lane.b32.xlu0 %v290, 126
        %v857 = vpop.permute.xlu0 %856
        %860 = vrot.lane.b32.xlu0 %v289, 14
        %v861 = vpop.permute.xlu0 %860
        %862 = vrot.lane.b32.xlu0 %v290, 14
        %v863 = vpop.permute.xlu0 %862
        %866 = vrot.lane.b32.xlu0 %v289, 30
        %v867 = vpop.permute.xlu0 %866
        %868 = vrot.lane.b32.xlu0 %v290, 30
        %v869 = vpop.permute.xlu0 %868
        %872 = vrot.lane.b32.xlu0 %v289, 46
        %v873 = vpop.permute.xlu0 %872
        %874 = vrot.lane.b32.xlu0 %v290, 46
        %v875 = vpop.permute.xlu0 %874
        %878 = vrot.lane.b32.xlu0 %v289, 62
        %v879 = vpop.permute.xlu0 %878
        %880 = vrot.lane.b32.xlu0 %v290, 62
        %v881 = vpop.permute.xlu0 %880
        %884 = vrot.lane.b32.xlu0 %v289, 78
        %v885 = vpop.permute.xlu0 %884
        %886 = vrot.lane.b32.xlu0 %v290, 78
        %v887 = vpop.permute.xlu0 %886
        %890 = vrot.lane.b32.xlu0 %v289, 94
        %v891 = vpop.permute.xlu0 %890
        %892 = vrot.lane.b32.xlu0 %v290, 94
        %v893 = vpop.permute.xlu0 %892
        %896 = vrot.lane.b32.xlu0 %v289, 110
        %v897 = vpop.permute.xlu0 %896
        %898 = vrot.lane.b32.xlu0 %v290, 110
        %v899 = vpop.permute.xlu0 %898
        %v902 = vsel %vm188, %v855, %v861
        %v903 = vsel %vm188, %v857, %v863
        %v904 = vsel %vm191, %v902, %v867
        %v905 = vsel %vm191, %v903, %v869
        %v906 = vsel %vm194, %v904, %v873
        %v907 = vsel %vm194, %v905, %v875
        %v908 = vsel %vm197, %v906, %v879
        %v909 = vsel %vm197, %v907, %v881
        %v910 = vsel %vm200, %v908, %v885
        %v911 = vsel %vm200, %v909, %v887
        %v912 = vsel %vm203, %v910, %v891
        %v913 = vsel %vm203, %v911, %v893
        %v914 = vsel %vm206, %v912, %v897
        %v915 = vsel %vm206, %v913, %v899
        %v916 = vld [vmem:[%s1 + $0xa] sm:$0x1]
        %v917 = vlaneseq
        %v918 = vshrl.u32 %v917, 7
        %v919 = vsub.s32 0, %v918
        %v920 = vrot.slane %v916, %v919
        %v921 = vmul.f32 %v920, %v914
        %v922 = vmul.f32 %v920, %v915
        %v923 = vadd.f32 %v852, %v921
        %v924 = vadd.f32 %v853, %v922
        %925 = vrot.lane.b32.xlu0 %v359, 126
        %v926 = vpop.permute.xlu0 %925
        %927 = vrot.lane.b32.xlu0 %v360, 126
        %v928 = vpop.permute.xlu0 %927
        %931 = vrot.lane.b32.xlu0 %v359, 14
        %v932 = vpop.permute.xlu0 %931
        %933 = vrot.lane.b32.xlu0 %v360, 14
        %v934 = vpop.permute.xlu0 %933
        %937 = vrot.lane.b32.xlu0 %v359, 30
        %v938 = vpop.permute.xlu0 %937
        %939 = vrot.lane.b32.xlu0 %v360, 30
        %v940 = vpop.permute.xlu0 %939
        %943 = vrot.lane.b32.xlu0 %v359, 46
        %v944 = vpop.permute.xlu0 %943
        %945 = vrot.lane.b32.xlu0 %v360, 46
        %v946 = vpop.permute.xlu0 %945
        %949 = vrot.lane.b32.xlu0 %v359, 62
        %v950 = vpop.permute.xlu0 %949
        %951 = vrot.lane.b32.xlu0 %v360, 62
        %v952 = vpop.permute.xlu0 %951
        %955 = vrot.lane.b32.xlu0 %v359, 78
        %v956 = vpop.permute.xlu0 %955
        %957 = vrot.lane.b32.xlu0 %v360, 78
        %v958 = vpop.permute.xlu0 %957
        %961 = vrot.lane.b32.xlu0 %v359, 94
        %v962 = vpop.permute.xlu0 %961
        %963 = vrot.lane.b32.xlu0 %v360, 94
        %v964 = vpop.permute.xlu0 %963
        %967 = vrot.lane.b32.xlu0 %v359, 110
        %v968 = vpop.permute.xlu0 %967
        %969 = vrot.lane.b32.xlu0 %v360, 110
        %v970 = vpop.permute.xlu0 %969
        %v973 = vsel %vm188, %v926, %v932
        %v974 = vsel %vm188, %v928, %v934
        %v975 = vsel %vm191, %v973, %v938
        %v976 = vsel %vm191, %v974, %v940
        %v977 = vsel %vm194, %v975, %v944
        %v978 = vsel %vm194, %v976, %v946
        %v979 = vsel %vm197, %v977, %v950
        %v980 = vsel %vm197, %v978, %v952
        %v981 = vsel %vm200, %v979, %v956
        %v982 = vsel %vm200, %v980, %v958
        %v983 = vsel %vm203, %v981, %v962
        %v984 = vsel %vm203, %v982, %v964
        %v985 = vsel %vm206, %v983, %v968
        %v986 = vsel %vm206, %v984, %v970
        %v987 = vld [vmem:[%s1 + $0xb] sm:$0x1]
        %v988 = vlaneseq
        %v989 = vshrl.u32 %v988, 7
        %v990 = vsub.s32 0, %v989
        %v991 = vrot.slane %v987, %v990
        %v992 = vmul.f32 %v991, %v985
        %v993 = vmul.f32 %v991, %v986
        %v994 = vadd.f32 %v923, %v992
        %v995 = vadd.f32 %v924, %v993
        %v996 = vld [vmem:[%s141 + $0x1] sm:$0xff]
        %v997 = vld [vmem:[%s141 + $0x9] sm:$0xff]
        %1000 = vrot.lane.b32.xlu0 %v996, 16
        %v1001 = vpop.permute.xlu0 %1000
        %1002 = vrot.lane.b32.xlu0 %v997, 16
        %v1003 = vpop.permute.xlu0 %1002
        %1006 = vrot.lane.b32.xlu0 %v996, 32
        %v1007 = vpop.permute.xlu0 %1006
        %1008 = vrot.lane.b32.xlu0 %v997, 32
        %v1009 = vpop.permute.xlu0 %1008
        %1012 = vrot.lane.b32.xlu0 %v996, 48
        %v1013 = vpop.permute.xlu0 %1012
        %1014 = vrot.lane.b32.xlu0 %v997, 48
        %v1015 = vpop.permute.xlu0 %1014
        %1018 = vrot.lane.b32.xlu0 %v996, 64
        %v1019 = vpop.permute.xlu0 %1018
        %1020 = vrot.lane.b32.xlu0 %v997, 64
        %v1021 = vpop.permute.xlu0 %1020
        %1024 = vrot.lane.b32.xlu0 %v996, 80
        %v1025 = vpop.permute.xlu0 %1024
        %1026 = vrot.lane.b32.xlu0 %v997, 80
        %v1027 = vpop.permute.xlu0 %1026
        %1030 = vrot.lane.b32.xlu0 %v996, 96
        %v1031 = vpop.permute.xlu0 %1030
        %1032 = vrot.lane.b32.xlu0 %v997, 96
        %v1033 = vpop.permute.xlu0 %1032
        %1036 = vrot.lane.b32.xlu0 %v996, 112
        %v1037 = vpop.permute.xlu0 %1036
        %1038 = vrot.lane.b32.xlu0 %v997, 112
        %v1039 = vpop.permute.xlu0 %1038
        %v1042 = vsel %vm188, %v996, %v1001
        %v1043 = vsel %vm188, %v997, %v1003
        %v1044 = vsel %vm191, %v1042, %v1007
        %v1045 = vsel %vm191, %v1043, %v1009
        %v1046 = vsel %vm194, %v1044, %v1013
        %v1047 = vsel %vm194, %v1045, %v1015
        %v1048 = vsel %vm197, %v1046, %v1019
        %v1049 = vsel %vm197, %v1047, %v1021
        %v1050 = vsel %vm200, %v1048, %v1025
        %v1051 = vsel %vm200, %v1049, %v1027
        %v1052 = vsel %vm203, %v1050, %v1031
        %v1053 = vsel %vm203, %v1051, %v1033
        %v1054 = vsel %vm206, %v1052, %v1037
        %v1055 = vsel %vm206, %v1053, %v1039
        %v1056 = vld [vmem:[%s1 + $0xc] sm:$0x1]
        %v1057 = vlaneseq
        %v1058 = vshrl.u32 %v1057, 7
        %v1059 = vsub.s32 0, %v1058
        %v1060 = vrot.slane %v1056, %v1059
        %v1061 = vmul.f32 %v1060, %v1054
        %v1062 = vmul.f32 %v1060, %v1055
        %v1063 = vadd.f32 %v994, %v1061
        %v1064 = vadd.f32 %v995, %v1062
        %v1065 = vld [vmem:[%s218 + $0x1] sm:$0xff]
        %v1066 = vld [vmem:[%s218 + $0x9] sm:$0xff]
        %1069 = vrot.lane.b32.xlu0 %v1065, 16
        %v1070 = vpop.permute.xlu0 %1069
        %1071 = vrot.lane.b32.xlu0 %v1066, 16
        %v1072 = vpop.permute.xlu0 %1071
        %1075 = vrot.lane.b32.xlu0 %v1065, 32
        %v1076 = vpop.permute.xlu0 %1075
        %1077 = vrot.lane.b32.xlu0 %v1066, 32
        %v1078 = vpop.permute.xlu0 %1077
        %1081 = vrot.lane.b32.xlu0 %v1065, 48
        %v1082 = vpop.permute.xlu0 %1081
        %1083 = vrot.lane.b32.xlu0 %v1066, 48
        %v1084 = vpop.permute.xlu0 %1083
        %1087 = vrot.lane.b32.xlu0 %v1065, 64
        %v1088 = vpop.permute.xlu0 %1087
        %1089 = vrot.lane.b32.xlu0 %v1066, 64
        %v1090 = vpop.permute.xlu0 %1089
        %1093 = vrot.lane.b32.xlu0 %v1065, 80
        %v1094 = vpop.permute.xlu0 %1093
        %1095 = vrot.lane.b32.xlu0 %v1066, 80
        %v1096 = vpop.permute.xlu0 %1095
        %1099 = vrot.lane.b32.xlu0 %v1065, 96
        %v1100 = vpop.permute.xlu0 %1099
        %1101 = vrot.lane.b32.xlu0 %v1066, 96
        %v1102 = vpop.permute.xlu0 %1101
        %1105 = vrot.lane.b32.xlu0 %v1065, 112
        %v1106 = vpop.permute.xlu0 %1105
        %1107 = vrot.lane.b32.xlu0 %v1066, 112
        %v1108 = vpop.permute.xlu0 %1107
        %v1111 = vsel %vm188, %v1065, %v1070
        %v1112 = vsel %vm188, %v1066, %v1072
        %v1113 = vsel %vm191, %v1111, %v1076
        %v1114 = vsel %vm191, %v1112, %v1078
        %v1115 = vsel %vm194, %v1113, %v1082
        %v1116 = vsel %vm194, %v1114, %v1084
        %v1117 = vsel %vm197, %v1115, %v1088
        %v1118 = vsel %vm197, %v1116, %v1090
        %v1119 = vsel %vm200, %v1117, %v1094
        %v1120 = vsel %vm200, %v1118, %v1096
        %v1121 = vsel %vm203, %v1119, %v1100
        %v1122 = vsel %vm203, %v1120, %v1102
        %v1123 = vsel %vm206, %v1121, %v1106
        %v1124 = vsel %vm206, %v1122, %v1108
        %v1125 = vld [vmem:[%s1 + $0xd] sm:$0x1]
        %v1126 = vlaneseq
        %v1127 = vshrl.u32 %v1126, 7
        %v1128 = vsub.s32 0, %v1127
        %v1129 = vrot.slane %v1125, %v1128
        %v1130 = vmul.f32 %v1129, %v1123
        %v1131 = vmul.f32 %v1129, %v1124
        %v1132 = vadd.f32 %v1063, %v1130
        %v1133 = vadd.f32 %v1064, %v1131
        %v1134 = vld [vmem:[%s288 + $0x1] sm:$0xff]
        %v1135 = vld [vmem:[%s288 + $0x9] sm:$0xff]
        %1138 = vrot.lane.b32.xlu0 %v1134, 16
        %v1139 = vpop.permute.xlu0 %1138
        %1140 = vrot.lane.b32.xlu0 %v1135, 16
        %v1141 = vpop.permute.xlu0 %1140
        %1144 = vrot.lane.b32.xlu0 %v1134, 32
        %v1145 = vpop.permute.xlu0 %1144
        %1146 = vrot.lane.b32.xlu0 %v1135, 32
        %v1147 = vpop.permute.xlu0 %1146
        %1150 = vrot.lane.b32.xlu0 %v1134, 48
        %v1151 = vpop.permute.xlu0 %1150
        %1152 = vrot.lane.b32.xlu0 %v1135, 48
        %v1153 = vpop.permute.xlu0 %1152
        %1156 = vrot.lane.b32.xlu0 %v1134, 64
        %v1157 = vpop.permute.xlu0 %1156
        %1158 = vrot.lane.b32.xlu0 %v1135, 64
        %v1159 = vpop.permute.xlu0 %1158
        %1162 = vrot.lane.b32.xlu0 %v1134, 80
        %v1163 = vpop.permute.xlu0 %1162
        %1164 = vrot.lane.b32.xlu0 %v1135, 80
        %v1165 = vpop.permute.xlu0 %1164
        %1168 = vrot.lane.b32.xlu0 %v1134, 96
        %v1169 = vpop.permute.xlu0 %1168
        %1170 = vrot.lane.b32.xlu0 %v1135, 96
        %v1171 = vpop.permute.xlu0 %1170
        %1174 = vrot.lane.b32.xlu0 %v1134, 112
        %v1175 = vpop.permute.xlu0 %1174
        %1176 = vrot.lane.b32.xlu0 %v1135, 112
        %v1177 = vpop.permute.xlu0 %1176
        %v1180 = vsel %vm188, %v1134, %v1139
        %v1181 = vsel %vm188, %v1135, %v1141
        %v1182 = vsel %vm191, %v1180, %v1145
        %v1183 = vsel %vm191, %v1181, %v1147
        %v1184 = vsel %vm194, %v1182, %v1151
        %v1185 = vsel %vm194, %v1183, %v1153
        %v1186 = vsel %vm197, %v1184, %v1157
        %v1187 = vsel %vm197, %v1185, %v1159
        %v1188 = vsel %vm200, %v1186, %v1163
        %v1189 = vsel %vm200, %v1187, %v1165
        %v1190 = vsel %vm203, %v1188, %v1169
        %v1191 = vsel %vm203, %v1189, %v1171
        %v1192 = vsel %vm206, %v1190, %v1175
        %v1193 = vsel %vm206, %v1191, %v1177
        %v1194 = vld [vmem:[%s1 + $0xe] sm:$0x1]
        %v1195 = vlaneseq
        %v1196 = vshrl.u32 %v1195, 7
        %v1197 = vsub.s32 0, %v1196
        %v1198 = vrot.slane %v1194, %v1197
        %v1199 = vmul.f32 %v1198, %v1192
        %v1200 = vmul.f32 %v1198, %v1193
        %v1201 = vadd.f32 %v1132, %v1199
        %v1202 = vadd.f32 %v1133, %v1200
        %v1203 = vld [vmem:[%s358 + $0x1] sm:$0xff]
        %v1204 = vld [vmem:[%s358 + $0x9] sm:$0xff]
        %1207 = vrot.lane.b32.xlu0 %v1203, 16
        %v1208 = vpop.permute.xlu0 %1207
        %1209 = vrot.lane.b32.xlu0 %v1204, 16
        %v1210 = vpop.permute.xlu0 %1209
        %1213 = vrot.lane.b32.xlu0 %v1203, 32
        %v1214 = vpop.permute.xlu0 %1213
        %1215 = vrot.lane.b32.xlu0 %v1204, 32
        %v1216 = vpop.permute.xlu0 %1215
        %1219 = vrot.lane.b32.xlu0 %v1203, 48
        %v1220 = vpop.permute.xlu0 %1219
        %1221 = vrot.lane.b32.xlu0 %v1204, 48
        %v1222 = vpop.permute.xlu0 %1221
        %1225 = vrot.lane.b32.xlu0 %v1203, 64
        %v1226 = vpop.permute.xlu0 %1225
        %1227 = vrot.lane.b32.xlu0 %v1204, 64
        %v1228 = vpop.permute.xlu0 %1227
        %1231 = vrot.lane.b32.xlu0 %v1203, 80
        %v1232 = vpop.permute.xlu0 %1231
        %1233 = vrot.lane.b32.xlu0 %v1204, 80
        %v1234 = vpop.permute.xlu0 %1233
        %1237 = vrot.lane.b32.xlu0 %v1203, 96
        %v1238 = vpop.permute.xlu0 %1237
        %1239 = vrot.lane.b32.xlu0 %v1204, 96
        %v1240 = vpop.permute.xlu0 %1239
        %1243 = vrot.lane.b32.xlu0 %v1203, 112
        %v1244 = vpop.permute.xlu0 %1243
        %1245 = vrot.lane.b32.xlu0 %v1204, 112
        %v1246 = vpop.permute.xlu0 %1245
        %v1249 = vsel %vm188, %v1203, %v1208
        %v1250 = vsel %vm188, %v1204, %v1210
        %v1251 = vsel %vm191, %v1249, %v1214
        %v1252 = vsel %vm191, %v1250, %v1216
        %v1253 = vsel %vm194, %v1251, %v1220
        %v1254 = vsel %vm194, %v1252, %v1222
        %v1255 = vsel %vm197, %v1253, %v1226
        %v1256 = vsel %vm197, %v1254, %v1228
        %v1257 = vsel %vm200, %v1255, %v1232
        %v1258 = vsel %vm200, %v1256, %v1234
        %v1259 = vsel %vm203, %v1257, %v1238
        %v1260 = vsel %vm203, %v1258, %v1240
        %v1261 = vsel %vm206, %v1259, %v1244
        %v1262 = vsel %vm206, %v1260, %v1246
        %v1263 = vld [vmem:[%s1 + $0xf] sm:$0x1]
        %v1264 = vlaneseq
        %v1265 = vshrl.u32 %v1264, 7
        %v1266 = vsub.s32 0, %v1265
        %v1267 = vrot.slane %v1263, %v1266
        %v1268 = vmul.f32 %v1267, %v1261
        %v1269 = vmul.f32 %v1267, %v1262
        %v1270 = vadd.f32 %v1201, %v1268
        %v1271 = vadd.f32 %v1202, %v1269
        %1272 = vrot.lane.b32.xlu0 %v996, 127
        %v1273 = vpop.permute.xlu0 %1272
        %1274 = vrot.lane.b32.xlu0 %v997, 127
        %v1275 = vpop.permute.xlu0 %1274
        %1278 = vrot.lane.b32.xlu0 %v996, 15
        %v1279 = vpop.permute.xlu0 %1278
        %1280 = vrot.lane.b32.xlu0 %v997, 15
        %v1281 = vpop.permute.xlu0 %1280
        %1284 = vrot.lane.b32.xlu0 %v996, 31
        %v1285 = vpop.permute.xlu0 %1284
        %1286 = vrot.lane.b32.xlu0 %v997, 31
        %v1287 = vpop.permute.xlu0 %1286
        %1290 = vrot.lane.b32.xlu0 %v996, 47
        %v1291 = vpop.permute.xlu0 %1290
        %1292 = vrot.lane.b32.xlu0 %v997, 47
        %v1293 = vpop.permute.xlu0 %1292
        %1296 = vrot.lane.b32.xlu0 %v996, 63
        %v1297 = vpop.permute.xlu0 %1296
        %1298 = vrot.lane.b32.xlu0 %v997, 63
        %v1299 = vpop.permute.xlu0 %1298
        %1302 = vrot.lane.b32.xlu0 %v996, 79
        %v1303 = vpop.permute.xlu0 %1302
        %1304 = vrot.lane.b32.xlu0 %v997, 79
        %v1305 = vpop.permute.xlu0 %1304
        %1308 = vrot.lane.b32.xlu0 %v996, 95
        %v1309 = vpop.permute.xlu0 %1308
        %1310 = vrot.lane.b32.xlu0 %v997, 95
        %v1311 = vpop.permute.xlu0 %1310
        %1314 = vrot.lane.b32.xlu0 %v996, 111
        %v1315 = vpop.permute.xlu0 %1314
        %1316 = vrot.lane.b32.xlu0 %v997, 111
        %v1317 = vpop.permute.xlu0 %1316
        %v1320 = vsel %vm188, %v1273, %v1279
        %v1321 = vsel %vm188, %v1275, %v1281
        %v1322 = vsel %vm191, %v1320, %v1285
        %v1323 = vsel %vm191, %v1321, %v1287
        %v1324 = vsel %vm194, %v1322, %v1291
        %v1325 = vsel %vm194, %v1323, %v1293
        %v1326 = vsel %vm197, %v1324, %v1297
        %v1327 = vsel %vm197, %v1325, %v1299
        %v1328 = vsel %vm200, %v1326, %v1303
        %v1329 = vsel %vm200, %v1327, %v1305
        %v1330 = vsel %vm203, %v1328, %v1309
        %v1331 = vsel %vm203, %v1329, %v1311
        %v1332 = vsel %vm206, %v1330, %v1315
        %v1333 = vsel %vm206, %v1331, %v1317
        %v1334 = vld [vmem:[%s1 + $0x10] sm:$0x1]
        %v1335 = vlaneseq
        %v1336 = vshrl.u32 %v1335, 7
        %v1337 = vsub.s32 0, %v1336
        %v1338 = vrot.slane %v1334, %v1337
        %v1339 = vmul.f32 %v1338, %v1332
        %v1340 = vmul.f32 %v1338, %v1333
        %v1341 = vadd.f32 %v1270, %v1339
        %v1342 = vadd.f32 %v1271, %v1340
        %1343 = vrot.lane.b32.xlu0 %v1065, 127
        %v1344 = vpop.permute.xlu0 %1343
        %1345 = vrot.lane.b32.xlu0 %v1066, 127
        %v1346 = vpop.permute.xlu0 %1345
        %1349 = vrot.lane.b32.xlu0 %v1065, 15
        %v1350 = vpop.permute.xlu0 %1349
        %1351 = vrot.lane.b32.xlu0 %v1066, 15
        %v1352 = vpop.permute.xlu0 %1351
        %1355 = vrot.lane.b32.xlu0 %v1065, 31
        %v1356 = vpop.permute.xlu0 %1355
        %1357 = vrot.lane.b32.xlu0 %v1066, 31
        %v1358 = vpop.permute.xlu0 %1357
        %1361 = vrot.lane.b32.xlu0 %v1065, 47
        %v1362 = vpop.permute.xlu0 %1361
        %1363 = vrot.lane.b32.xlu0 %v1066, 47
        %v1364 = vpop.permute.xlu0 %1363
        %1367 = vrot.lane.b32.xlu0 %v1065, 63
        %v1368 = vpop.permute.xlu0 %1367
        %1369 = vrot.lane.b32.xlu0 %v1066, 63
        %v1370 = vpop.permute.xlu0 %1369
        %1373 = vrot.lane.b32.xlu0 %v1065, 79
        %v1374 = vpop.permute.xlu0 %1373
        %1375 = vrot.lane.b32.xlu0 %v1066, 79
        %v1376 = vpop.permute.xlu0 %1375
        %1379 = vrot.lane.b32.xlu0 %v1065, 95
        %v1380 = vpop.permute.xlu0 %1379
        %1381 = vrot.lane.b32.xlu0 %v1066, 95
        %v1382 = vpop.permute.xlu0 %1381
        %1385 = vrot.lane.b32.xlu0 %v1065, 111
        %v1386 = vpop.permute.xlu0 %1385
        %1387 = vrot.lane.b32.xlu0 %v1066, 111
        %v1388 = vpop.permute.xlu0 %1387
        %v1391 = vsel %vm188, %v1344, %v1350
        %v1392 = vsel %vm188, %v1346, %v1352
        %v1393 = vsel %vm191, %v1391, %v1356
        %v1394 = vsel %vm191, %v1392, %v1358
        %v1395 = vsel %vm194, %v1393, %v1362
        %v1396 = vsel %vm194, %v1394, %v1364
        %v1397 = vsel %vm197, %v1395, %v1368
        %v1398 = vsel %vm197, %v1396, %v1370
        %v1399 = vsel %vm200, %v1397, %v1374
        %v1400 = vsel %vm200, %v1398, %v1376
        %v1401 = vsel %vm203, %v1399, %v1380
        %v1402 = vsel %vm203, %v1400, %v1382
        %v1403 = vsel %vm206, %v1401, %v1386
        %v1404 = vsel %vm206, %v1402, %v1388
        %v1405 = vld [vmem:[%s1 + $0x11] sm:$0x1]
        %v1406 = vlaneseq
        %v1407 = vshrl.u32 %v1406, 7
        %v1408 = vsub.s32 0, %v1407
        %v1409 = vrot.slane %v1405, %v1408
        %v1410 = vmul.f32 %v1409, %v1403
        %v1411 = vmul.f32 %v1409, %v1404
        %v1412 = vadd.f32 %v1341, %v1410
        %v1413 = vadd.f32 %v1342, %v1411
        %1414 = vrot.lane.b32.xlu0 %v1134, 127
        %v1415 = vpop.permute.xlu0 %1414
        %1416 = vrot.lane.b32.xlu0 %v1135, 127
        %v1417 = vpop.permute.xlu0 %1416
        %1420 = vrot.lane.b32.xlu0 %v1134, 15
        %v1421 = vpop.permute.xlu0 %1420
        %1422 = vrot.lane.b32.xlu0 %v1135, 15
        %v1423 = vpop.permute.xlu0 %1422
        %1426 = vrot.lane.b32.xlu0 %v1134, 31
        %v1427 = vpop.permute.xlu0 %1426
        %1428 = vrot.lane.b32.xlu0 %v1135, 31
        %v1429 = vpop.permute.xlu0 %1428
        %1432 = vrot.lane.b32.xlu0 %v1134, 47
        %v1433 = vpop.permute.xlu0 %1432
        %1434 = vrot.lane.b32.xlu0 %v1135, 47
        %v1435 = vpop.permute.xlu0 %1434
        %1438 = vrot.lane.b32.xlu0 %v1134, 63
        %v1439 = vpop.permute.xlu0 %1438
        %1440 = vrot.lane.b32.xlu0 %v1135, 63
        %v1441 = vpop.permute.xlu0 %1440
        %1444 = vrot.lane.b32.xlu0 %v1134, 79
        %v1445 = vpop.permute.xlu0 %1444
        %1446 = vrot.lane.b32.xlu0 %v1135, 79
        %v1447 = vpop.permute.xlu0 %1446
        %1450 = vrot.lane.b32.xlu0 %v1134, 95
        %v1451 = vpop.permute.xlu0 %1450
        %1452 = vrot.lane.b32.xlu0 %v1135, 95
        %v1453 = vpop.permute.xlu0 %1452
        %1456 = vrot.lane.b32.xlu0 %v1134, 111
        %v1457 = vpop.permute.xlu0 %1456
        %1458 = vrot.lane.b32.xlu0 %v1135, 111
        %v1459 = vpop.permute.xlu0 %1458
        %v1462 = vsel %vm188, %v1415, %v1421
        %v1463 = vsel %vm188, %v1417, %v1423
        %v1464 = vsel %vm191, %v1462, %v1427
        %v1465 = vsel %vm191, %v1463, %v1429
        %v1466 = vsel %vm194, %v1464, %v1433
        %v1467 = vsel %vm194, %v1465, %v1435
        %v1468 = vsel %vm197, %v1466, %v1439
        %v1469 = vsel %vm197, %v1467, %v1441
        %v1470 = vsel %vm200, %v1468, %v1445
        %v1471 = vsel %vm200, %v1469, %v1447
        %v1472 = vsel %vm203, %v1470, %v1451
        %v1473 = vsel %vm203, %v1471, %v1453
        %v1474 = vsel %vm206, %v1472, %v1457
        %v1475 = vsel %vm206, %v1473, %v1459
        %v1476 = vld [vmem:[%s1 + $0x12] sm:$0x1]
        %v1477 = vlaneseq
        %v1478 = vshrl.u32 %v1477, 7
        %v1479 = vsub.s32 0, %v1478
        %v1480 = vrot.slane %v1476, %v1479
        %v1481 = vmul.f32 %v1480, %v1474
        %v1482 = vmul.f32 %v1480, %v1475
        %v1483 = vadd.f32 %v1412, %v1481
        %v1484 = vadd.f32 %v1413, %v1482
        %1485 = vrot.lane.b32.xlu0 %v1203, 127
        %v1486 = vpop.permute.xlu0 %1485
        %1487 = vrot.lane.b32.xlu0 %v1204, 127
        %v1488 = vpop.permute.xlu0 %1487
        %1491 = vrot.lane.b32.xlu0 %v1203, 15
        %v1492 = vpop.permute.xlu0 %1491
        %1493 = vrot.lane.b32.xlu0 %v1204, 15
        %v1494 = vpop.permute.xlu0 %1493
        %1497 = vrot.lane.b32.xlu0 %v1203, 31
        %v1498 = vpop.permute.xlu0 %1497
        %1499 = vrot.lane.b32.xlu0 %v1204, 31
        %v1500 = vpop.permute.xlu0 %1499
        %1503 = vrot.lane.b32.xlu0 %v1203, 47
        %v1504 = vpop.permute.xlu0 %1503
        %1505 = vrot.lane.b32.xlu0 %v1204, 47
        %v1506 = vpop.permute.xlu0 %1505
        %1509 = vrot.lane.b32.xlu0 %v1203, 63
        %v1510 = vpop.permute.xlu0 %1509
        %1511 = vrot.lane.b32.xlu0 %v1204, 63
        %v1512 = vpop.permute.xlu0 %1511
        %1515 = vrot.lane.b32.xlu0 %v1203, 79
        %v1516 = vpop.permute.xlu0 %1515
        %1517 = vrot.lane.b32.xlu0 %v1204, 79
        %v1518 = vpop.permute.xlu0 %1517
        %1521 = vrot.lane.b32.xlu0 %v1203, 95
        %v1522 = vpop.permute.xlu0 %1521
        %1523 = vrot.lane.b32.xlu0 %v1204, 95
        %v1524 = vpop.permute.xlu0 %1523
        %1527 = vrot.lane.b32.xlu0 %v1203, 111
        %v1528 = vpop.permute.xlu0 %1527
        %1529 = vrot.lane.b32.xlu0 %v1204, 111
        %v1530 = vpop.permute.xlu0 %1529
        %v1533 = vsel %vm188, %v1486, %v1492
        %v1534 = vsel %vm188, %v1488, %v1494
        %v1535 = vsel %vm191, %v1533, %v1498
        %v1536 = vsel %vm191, %v1534, %v1500
        %v1537 = vsel %vm194, %v1535, %v1504
        %v1538 = vsel %vm194, %v1536, %v1506
        %v1539 = vsel %vm197, %v1537, %v1510
        %v1540 = vsel %vm197, %v1538, %v1512
        %v1541 = vsel %vm200, %v1539, %v1516
        %v1542 = vsel %vm200, %v1540, %v1518
        %v1543 = vsel %vm203, %v1541, %v1522
        %v1544 = vsel %vm203, %v1542, %v1524
        %v1545 = vsel %vm206, %v1543, %v1528
        %v1546 = vsel %vm206, %v1544, %v1530
        %v1547 = vld [vmem:[%s1 + $0x13] sm:$0x1]
        %v1548 = vlaneseq
        %v1549 = vshrl.u32 %v1548, 7
        %v1550 = vsub.s32 0, %v1549
        %v1551 = vrot.slane %v1547, %v1550
        %v1552 = vmul.f32 %v1551, %v1545
        %v1553 = vmul.f32 %v1551, %v1546
        %v1554 = vadd.f32 %v1483, %v1552
        %v1555 = vadd.f32 %v1484, %v1553
        %1556 = vrot.lane.b32.xlu0 %v996, 126
        %v1557 = vpop.permute.xlu0 %1556
        %1558 = vrot.lane.b32.xlu0 %v997, 126
        %v1559 = vpop.permute.xlu0 %1558
        %1562 = vrot.lane.b32.xlu0 %v996, 14
        %v1563 = vpop.permute.xlu0 %1562
        %1564 = vrot.lane.b32.xlu0 %v997, 14
        %v1565 = vpop.permute.xlu0 %1564
        %1568 = vrot.lane.b32.xlu0 %v996, 30
        %v1569 = vpop.permute.xlu0 %1568
        %1570 = vrot.lane.b32.xlu0 %v997, 30
        %v1571 = vpop.permute.xlu0 %1570
        %1574 = vrot.lane.b32.xlu0 %v996, 46
        %v1575 = vpop.permute.xlu0 %1574
        %1576 = vrot.lane.b32.xlu0 %v997, 46
        %v1577 = vpop.permute.xlu0 %1576
        %1580 = vrot.lane.b32.xlu0 %v996, 62
        %v1581 = vpop.permute.xlu0 %1580
        %1582 = vrot.lane.b32.xlu0 %v997, 62
        %v1583 = vpop.permute.xlu0 %1582
        %1586 = vrot.lane.b32.xlu0 %v996, 78
        %v1587 = vpop.permute.xlu0 %1586
        %1588 = vrot.lane.b32.xlu0 %v997, 78
        %v1589 = vpop.permute.xlu0 %1588
        %1592 = vrot.lane.b32.xlu0 %v996, 94
        %v1593 = vpop.permute.xlu0 %1592
        %1594 = vrot.lane.b32.xlu0 %v997, 94
        %v1595 = vpop.permute.xlu0 %1594
        %1598 = vrot.lane.b32.xlu0 %v996, 110
        %v1599 = vpop.permute.xlu0 %1598
        %1600 = vrot.lane.b32.xlu0 %v997, 110
        %v1601 = vpop.permute.xlu0 %1600
        %v1604 = vsel %vm188, %v1557, %v1563
        %v1605 = vsel %vm188, %v1559, %v1565
        %v1606 = vsel %vm191, %v1604, %v1569
        %v1607 = vsel %vm191, %v1605, %v1571
        %v1608 = vsel %vm194, %v1606, %v1575
        %v1609 = vsel %vm194, %v1607, %v1577
        %v1610 = vsel %vm197, %v1608, %v1581
        %v1611 = vsel %vm197, %v1609, %v1583
        %v1612 = vsel %vm200, %v1610, %v1587
        %v1613 = vsel %vm200, %v1611, %v1589
        %v1614 = vsel %vm203, %v1612, %v1593
        %v1615 = vsel %vm203, %v1613, %v1595
        %v1616 = vsel %vm206, %v1614, %v1599
        %v1617 = vsel %vm206, %v1615, %v1601
        %v1618 = vld [vmem:[%s1 + $0x14] sm:$0x1]
        %v1619 = vlaneseq
        %v1620 = vshrl.u32 %v1619, 7
        %v1621 = vsub.s32 0, %v1620
        %v1622 = vrot.slane %v1618, %v1621
        %v1623 = vmul.f32 %v1622, %v1616
        %v1624 = vmul.f32 %v1622, %v1617
        %v1625 = vadd.f32 %v1554, %v1623
        %v1626 = vadd.f32 %v1555, %v1624
        %1627 = vrot.lane.b32.xlu0 %v1065, 126
        %v1628 = vpop.permute.xlu0 %1627
        %1629 = vrot.lane.b32.xlu0 %v1066, 126
        %v1630 = vpop.permute.xlu0 %1629
        %1633 = vrot.lane.b32.xlu0 %v1065, 14
        %v1634 = vpop.permute.xlu0 %1633
        %1635 = vrot.lane.b32.xlu0 %v1066, 14
        %v1636 = vpop.permute.xlu0 %1635
        %1639 = vrot.lane.b32.xlu0 %v1065, 30
        %v1640 = vpop.permute.xlu0 %1639
        %1641 = vrot.lane.b32.xlu0 %v1066, 30
        %v1642 = vpop.permute.xlu0 %1641
        %1645 = vrot.lane.b32.xlu0 %v1065, 46
        %v1646 = vpop.permute.xlu0 %1645
        %1647 = vrot.lane.b32.xlu0 %v1066, 46
        %v1648 = vpop.permute.xlu0 %1647
        %1651 = vrot.lane.b32.xlu0 %v1065, 62
        %v1652 = vpop.permute.xlu0 %1651
        %1653 = vrot.lane.b32.xlu0 %v1066, 62
        %v1654 = vpop.permute.xlu0 %1653
        %1657 = vrot.lane.b32.xlu0 %v1065, 78
        %v1658 = vpop.permute.xlu0 %1657
        %1659 = vrot.lane.b32.xlu0 %v1066, 78
        %v1660 = vpop.permute.xlu0 %1659
        %1663 = vrot.lane.b32.xlu0 %v1065, 94
        %v1664 = vpop.permute.xlu0 %1663
        %1665 = vrot.lane.b32.xlu0 %v1066, 94
        %v1666 = vpop.permute.xlu0 %1665
        %1669 = vrot.lane.b32.xlu0 %v1065, 110
        %v1670 = vpop.permute.xlu0 %1669
        %1671 = vrot.lane.b32.xlu0 %v1066, 110
        %v1672 = vpop.permute.xlu0 %1671
        %v1675 = vsel %vm188, %v1628, %v1634
        %v1676 = vsel %vm188, %v1630, %v1636
        %v1677 = vsel %vm191, %v1675, %v1640
        %v1678 = vsel %vm191, %v1676, %v1642
        %v1679 = vsel %vm194, %v1677, %v1646
        %v1680 = vsel %vm194, %v1678, %v1648
        %v1681 = vsel %vm197, %v1679, %v1652
        %v1682 = vsel %vm197, %v1680, %v1654
        %v1683 = vsel %vm200, %v1681, %v1658
        %v1684 = vsel %vm200, %v1682, %v1660
        %v1685 = vsel %vm203, %v1683, %v1664
        %v1686 = vsel %vm203, %v1684, %v1666
        %v1687 = vsel %vm206, %v1685, %v1670
        %v1688 = vsel %vm206, %v1686, %v1672
        %v1689 = vld [vmem:[%s1 + $0x15] sm:$0x1]
        %v1690 = vlaneseq
        %v1691 = vshrl.u32 %v1690, 7
        %v1692 = vsub.s32 0, %v1691
        %v1693 = vrot.slane %v1689, %v1692
        %v1694 = vmul.f32 %v1693, %v1687
        %v1695 = vmul.f32 %v1693, %v1688
        %v1696 = vadd.f32 %v1625, %v1694
        %v1697 = vadd.f32 %v1626, %v1695
        %1698 = vrot.lane.b32.xlu0 %v1134, 126
        %v1699 = vpop.permute.xlu0 %1698
        %1700 = vrot.lane.b32.xlu0 %v1135, 126
        %v1701 = vpop.permute.xlu0 %1700
        %1704 = vrot.lane.b32.xlu0 %v1134, 14
        %v1705 = vpop.permute.xlu0 %1704
        %1706 = vrot.lane.b32.xlu0 %v1135, 14
        %v1707 = vpop.permute.xlu0 %1706
        %1710 = vrot.lane.b32.xlu0 %v1134, 30
        %v1711 = vpop.permute.xlu0 %1710
        %1712 = vrot.lane.b32.xlu0 %v1135, 30
        %v1713 = vpop.permute.xlu0 %1712
        %1716 = vrot.lane.b32.xlu0 %v1134, 46
        %v1717 = vpop.permute.xlu0 %1716
        %1718 = vrot.lane.b32.xlu0 %v1135, 46
        %v1719 = vpop.permute.xlu0 %1718
        %1722 = vrot.lane.b32.xlu0 %v1134, 62
        %v1723 = vpop.permute.xlu0 %1722
        %1724 = vrot.lane.b32.xlu0 %v1135, 62
        %v1725 = vpop.permute.xlu0 %1724
        %1728 = vrot.lane.b32.xlu0 %v1134, 78
        %v1729 = vpop.permute.xlu0 %1728
        %1730 = vrot.lane.b32.xlu0 %v1135, 78
        %v1731 = vpop.permute.xlu0 %1730
        %1734 = vrot.lane.b32.xlu0 %v1134, 94
        %v1735 = vpop.permute.xlu0 %1734
        %1736 = vrot.lane.b32.xlu0 %v1135, 94
        %v1737 = vpop.permute.xlu0 %1736
        %1740 = vrot.lane.b32.xlu0 %v1134, 110
        %v1741 = vpop.permute.xlu0 %1740
        %1742 = vrot.lane.b32.xlu0 %v1135, 110
        %v1743 = vpop.permute.xlu0 %1742
        %v1746 = vsel %vm188, %v1699, %v1705
        %v1747 = vsel %vm188, %v1701, %v1707
        %v1748 = vsel %vm191, %v1746, %v1711
        %v1749 = vsel %vm191, %v1747, %v1713
        %v1750 = vsel %vm194, %v1748, %v1717
        %v1751 = vsel %vm194, %v1749, %v1719
        %v1752 = vsel %vm197, %v1750, %v1723
        %v1753 = vsel %vm197, %v1751, %v1725
        %v1754 = vsel %vm200, %v1752, %v1729
        %v1755 = vsel %vm200, %v1753, %v1731
        %v1756 = vsel %vm203, %v1754, %v1735
        %v1757 = vsel %vm203, %v1755, %v1737
        %v1758 = vsel %vm206, %v1756, %v1741
        %v1759 = vsel %vm206, %v1757, %v1743
        %v1760 = vld [vmem:[%s1 + $0x16] sm:$0x1]
        %v1761 = vlaneseq
        %v1762 = vshrl.u32 %v1761, 7
        %v1763 = vsub.s32 0, %v1762
        %v1764 = vrot.slane %v1760, %v1763
        %v1765 = vmul.f32 %v1764, %v1758
        %v1766 = vmul.f32 %v1764, %v1759
        %v1767 = vadd.f32 %v1696, %v1765
        %v1768 = vadd.f32 %v1697, %v1766
        %1769 = vrot.lane.b32.xlu0 %v1203, 126
        %v1770 = vpop.permute.xlu0 %1769
        %1771 = vrot.lane.b32.xlu0 %v1204, 126
        %v1772 = vpop.permute.xlu0 %1771
        %1775 = vrot.lane.b32.xlu0 %v1203, 14
        %v1776 = vpop.permute.xlu0 %1775
        %1777 = vrot.lane.b32.xlu0 %v1204, 14
        %v1778 = vpop.permute.xlu0 %1777
        %1781 = vrot.lane.b32.xlu0 %v1203, 30
        %v1782 = vpop.permute.xlu0 %1781
        %1783 = vrot.lane.b32.xlu0 %v1204, 30
        %v1784 = vpop.permute.xlu0 %1783
        %1787 = vrot.lane.b32.xlu0 %v1203, 46
        %v1788 = vpop.permute.xlu0 %1787
        %1789 = vrot.lane.b32.xlu0 %v1204, 46
        %v1790 = vpop.permute.xlu0 %1789
        %1793 = vrot.lane.b32.xlu0 %v1203, 62
        %v1794 = vpop.permute.xlu0 %1793
        %1795 = vrot.lane.b32.xlu0 %v1204, 62
        %v1796 = vpop.permute.xlu0 %1795
        %1799 = vrot.lane.b32.xlu0 %v1203, 78
        %v1800 = vpop.permute.xlu0 %1799
        %1801 = vrot.lane.b32.xlu0 %v1204, 78
        %v1802 = vpop.permute.xlu0 %1801
        %1805 = vrot.lane.b32.xlu0 %v1203, 94
        %v1806 = vpop.permute.xlu0 %1805
        %1807 = vrot.lane.b32.xlu0 %v1204, 94
        %v1808 = vpop.permute.xlu0 %1807
        %1811 = vrot.lane.b32.xlu0 %v1203, 110
        %v1812 = vpop.permute.xlu0 %1811
        %1813 = vrot.lane.b32.xlu0 %v1204, 110
        %v1814 = vpop.permute.xlu0 %1813
        %v1817 = vsel %vm188, %v1770, %v1776
        %v1818 = vsel %vm188, %v1772, %v1778
        %v1819 = vsel %vm191, %v1817, %v1782
        %v1820 = vsel %vm191, %v1818, %v1784
        %v1821 = vsel %vm194, %v1819, %v1788
        %v1822 = vsel %vm194, %v1820, %v1790
        %v1823 = vsel %vm197, %v1821, %v1794
        %v1824 = vsel %vm197, %v1822, %v1796
        %v1825 = vsel %vm200, %v1823, %v1800
        %v1826 = vsel %vm200, %v1824, %v1802
        %v1827 = vsel %vm203, %v1825, %v1806
        %v1828 = vsel %vm203, %v1826, %v1808
        %v1829 = vsel %vm206, %v1827, %v1812
        %v1830 = vsel %vm206, %v1828, %v1814
        %v1831 = vld [vmem:[%s1 + $0x17] sm:$0x1]
        %v1832 = vlaneseq
        %v1833 = vshrl.u32 %v1832, 7
        %v1834 = vsub.s32 0, %v1833
        %v1835 = vrot.slane %v1831, %v1834
        %v1836 = vmul.f32 %v1835, %v1829
        %v1837 = vmul.f32 %v1835, %v1830
        %v1838 = vadd.f32 %v1767, %v1836
        %v1839 = vadd.f32 %v1768, %v1837
        %v1840 = vld [vmem:[%s141 + $0x2] sm:$0xff]
        %v1841 = vld [vmem:[%s141 + $0xa] sm:$0xff]
        %1844 = vrot.lane.b32.xlu0 %v1840, 16
        %v1845 = vpop.permute.xlu0 %1844
        %1846 = vrot.lane.b32.xlu0 %v1841, 16
        %v1847 = vpop.permute.xlu0 %1846
        %1850 = vrot.lane.b32.xlu0 %v1840, 32
        %v1851 = vpop.permute.xlu0 %1850
        %1852 = vrot.lane.b32.xlu0 %v1841, 32
        %v1853 = vpop.permute.xlu0 %1852
        %1856 = vrot.lane.b32.xlu0 %v1840, 48
        %v1857 = vpop.permute.xlu0 %1856
        %1858 = vrot.lane.b32.xlu0 %v1841, 48
        %v1859 = vpop.permute.xlu0 %1858
        %1862 = vrot.lane.b32.xlu0 %v1840, 64
        %v1863 = vpop.permute.xlu0 %1862
        %1864 = vrot.lane.b32.xlu0 %v1841, 64
        %v1865 = vpop.permute.xlu0 %1864
        %1868 = vrot.lane.b32.xlu0 %v1840, 80
        %v1869 = vpop.permute.xlu0 %1868
        %1870 = vrot.lane.b32.xlu0 %v1841, 80
        %v1871 = vpop.permute.xlu0 %1870
        %1874 = vrot.lane.b32.xlu0 %v1840, 96
        %v1875 = vpop.permute.xlu0 %1874
        %1876 = vrot.lane.b32.xlu0 %v1841, 96
        %v1877 = vpop.permute.xlu0 %1876
        %1880 = vrot.lane.b32.xlu0 %v1840, 112
        %v1881 = vpop.permute.xlu0 %1880
        %1882 = vrot.lane.b32.xlu0 %v1841, 112
        %v1883 = vpop.permute.xlu0 %1882
        %v1886 = vsel %vm188, %v1840, %v1845
        %v1887 = vsel %vm188, %v1841, %v1847
        %v1888 = vsel %vm191, %v1886, %v1851
        %v1889 = vsel %vm191, %v1887, %v1853
        %v1890 = vsel %vm194, %v1888, %v1857
        %v1891 = vsel %vm194, %v1889, %v1859
        %v1892 = vsel %vm197, %v1890, %v1863
        %v1893 = vsel %vm197, %v1891, %v1865
        %v1894 = vsel %vm200, %v1892, %v1869
        %v1895 = vsel %vm200, %v1893, %v1871
        %v1896 = vsel %vm203, %v1894, %v1875
        %v1897 = vsel %vm203, %v1895, %v1877
        %v1898 = vsel %vm206, %v1896, %v1881
        %v1899 = vsel %vm206, %v1897, %v1883
        %v1900 = vld [vmem:[%s1 + $0x18] sm:$0x1]
        %v1901 = vlaneseq
        %v1902 = vshrl.u32 %v1901, 7
        %v1903 = vsub.s32 0, %v1902
        %v1904 = vrot.slane %v1900, %v1903
        %v1905 = vmul.f32 %v1904, %v1898
        %v1906 = vmul.f32 %v1904, %v1899
        %v1907 = vadd.f32 %v1838, %v1905
        %v1908 = vadd.f32 %v1839, %v1906
        %v1909 = vld [vmem:[%s218 + $0x2] sm:$0xff]
        %v1910 = vld [vmem:[%s218 + $0xa] sm:$0xff]
        %1913 = vrot.lane.b32.xlu0 %v1909, 16
        %v1914 = vpop.permute.xlu0 %1913
        %1915 = vrot.lane.b32.xlu0 %v1910, 16
        %v1916 = vpop.permute.xlu0 %1915
        %1919 = vrot.lane.b32.xlu0 %v1909, 32
        %v1920 = vpop.permute.xlu0 %1919
        %1921 = vrot.lane.b32.xlu0 %v1910, 32
        %v1922 = vpop.permute.xlu0 %1921
        %1925 = vrot.lane.b32.xlu0 %v1909, 48
        %v1926 = vpop.permute.xlu0 %1925
        %1927 = vrot.lane.b32.xlu0 %v1910, 48
        %v1928 = vpop.permute.xlu0 %1927
        %1931 = vrot.lane.b32.xlu0 %v1909, 64
        %v1932 = vpop.permute.xlu0 %1931
        %1933 = vrot.lane.b32.xlu0 %v1910, 64
        %v1934 = vpop.permute.xlu0 %1933
        %1937 = vrot.lane.b32.xlu0 %v1909, 80
        %v1938 = vpop.permute.xlu0 %1937
        %1939 = vrot.lane.b32.xlu0 %v1910, 80
        %v1940 = vpop.permute.xlu0 %1939
        %1943 = vrot.lane.b32.xlu0 %v1909, 96
        %v1944 = vpop.permute.xlu0 %1943
        %1945 = vrot.lane.b32.xlu0 %v1910, 96
        %v1946 = vpop.permute.xlu0 %1945
        %1949 = vrot.lane.b32.xlu0 %v1909, 112
        %v1950 = vpop.permute.xlu0 %1949
        %1951 = vrot.lane.b32.xlu0 %v1910, 112
        %v1952 = vpop.permute.xlu0 %1951
        %v1955 = vsel %vm188, %v1909, %v1914
        %v1956 = vsel %vm188, %v1910, %v1916
        %v1957 = vsel %vm191, %v1955, %v1920
        %v1958 = vsel %vm191, %v1956, %v1922
        %v1959 = vsel %vm194, %v1957, %v1926
        %v1960 = vsel %vm194, %v1958, %v1928
        %v1961 = vsel %vm197, %v1959, %v1932
        %v1962 = vsel %vm197, %v1960, %v1934
        %v1963 = vsel %vm200, %v1961, %v1938
        %v1964 = vsel %vm200, %v1962, %v1940
        %v1965 = vsel %vm203, %v1963, %v1944
        %v1966 = vsel %vm203, %v1964, %v1946
        %v1967 = vsel %vm206, %v1965, %v1950
        %v1968 = vsel %vm206, %v1966, %v1952
        %v1969 = vld [vmem:[%s1 + $0x19] sm:$0x1]
        %v1970 = vlaneseq
        %v1971 = vshrl.u32 %v1970, 7
        %v1972 = vsub.s32 0, %v1971
        %v1973 = vrot.slane %v1969, %v1972
        %v1974 = vmul.f32 %v1973, %v1967
        %v1975 = vmul.f32 %v1973, %v1968
        %v1976 = vadd.f32 %v1907, %v1974
        %v1977 = vadd.f32 %v1908, %v1975
        %v1978 = vld [vmem:[%s288 + $0x2] sm:$0xff]
        %v1979 = vld [vmem:[%s288 + $0xa] sm:$0xff]
        %1982 = vrot.lane.b32.xlu0 %v1978, 16
        %v1983 = vpop.permute.xlu0 %1982
        %1984 = vrot.lane.b32.xlu0 %v1979, 16
        %v1985 = vpop.permute.xlu0 %1984
        %1988 = vrot.lane.b32.xlu0 %v1978, 32
        %v1989 = vpop.permute.xlu0 %1988
        %1990 = vrot.lane.b32.xlu0 %v1979, 32
        %v1991 = vpop.permute.xlu0 %1990
        %1994 = vrot.lane.b32.xlu0 %v1978, 48
        %v1995 = vpop.permute.xlu0 %1994
        %1996 = vrot.lane.b32.xlu0 %v1979, 48
        %v1997 = vpop.permute.xlu0 %1996
        %2000 = vrot.lane.b32.xlu0 %v1978, 64
        %v2001 = vpop.permute.xlu0 %2000
        %2002 = vrot.lane.b32.xlu0 %v1979, 64
        %v2003 = vpop.permute.xlu0 %2002
        %2006 = vrot.lane.b32.xlu0 %v1978, 80
        %v2007 = vpop.permute.xlu0 %2006
        %2008 = vrot.lane.b32.xlu0 %v1979, 80
        %v2009 = vpop.permute.xlu0 %2008
        %2012 = vrot.lane.b32.xlu0 %v1978, 96
        %v2013 = vpop.permute.xlu0 %2012
        %2014 = vrot.lane.b32.xlu0 %v1979, 96
        %v2015 = vpop.permute.xlu0 %2014
        %2018 = vrot.lane.b32.xlu0 %v1978, 112
        %v2019 = vpop.permute.xlu0 %2018
        %2020 = vrot.lane.b32.xlu0 %v1979, 112
        %v2021 = vpop.permute.xlu0 %2020
        %v2024 = vsel %vm188, %v1978, %v1983
        %v2025 = vsel %vm188, %v1979, %v1985
        %v2026 = vsel %vm191, %v2024, %v1989
        %v2027 = vsel %vm191, %v2025, %v1991
        %v2028 = vsel %vm194, %v2026, %v1995
        %v2029 = vsel %vm194, %v2027, %v1997
        %v2030 = vsel %vm197, %v2028, %v2001
        %v2031 = vsel %vm197, %v2029, %v2003
        %v2032 = vsel %vm200, %v2030, %v2007
        %v2033 = vsel %vm200, %v2031, %v2009
        %v2034 = vsel %vm203, %v2032, %v2013
        %v2035 = vsel %vm203, %v2033, %v2015
        %v2036 = vsel %vm206, %v2034, %v2019
        %v2037 = vsel %vm206, %v2035, %v2021
        %v2038 = vld [vmem:[%s1 + $0x1a] sm:$0x1]
        %v2039 = vlaneseq
        %v2040 = vshrl.u32 %v2039, 7
        %v2041 = vsub.s32 0, %v2040
        %v2042 = vrot.slane %v2038, %v2041
        %v2043 = vmul.f32 %v2042, %v2036
        %v2044 = vmul.f32 %v2042, %v2037
        %v2045 = vadd.f32 %v1976, %v2043
        %v2046 = vadd.f32 %v1977, %v2044
        %v2047 = vld [vmem:[%s358 + $0x2] sm:$0xff]
        %v2048 = vld [vmem:[%s358 + $0xa] sm:$0xff]
        %2051 = vrot.lane.b32.xlu0 %v2047, 16
        %v2052 = vpop.permute.xlu0 %2051
        %2053 = vrot.lane.b32.xlu0 %v2048, 16
        %v2054 = vpop.permute.xlu0 %2053
        %2057 = vrot.lane.b32.xlu0 %v2047, 32
        %v2058 = vpop.permute.xlu0 %2057
        %2059 = vrot.lane.b32.xlu0 %v2048, 32
        %v2060 = vpop.permute.xlu0 %2059
        %2063 = vrot.lane.b32.xlu0 %v2047, 48
        %v2064 = vpop.permute.xlu0 %2063
        %2065 = vrot.lane.b32.xlu0 %v2048, 48
        %v2066 = vpop.permute.xlu0 %2065
        %2069 = vrot.lane.b32.xlu0 %v2047, 64
        %v2070 = vpop.permute.xlu0 %2069
        %2071 = vrot.lane.b32.xlu0 %v2048, 64
        %v2072 = vpop.permute.xlu0 %2071
        %2075 = vrot.lane.b32.xlu0 %v2047, 80
        %v2076 = vpop.permute.xlu0 %2075
        %2077 = vrot.lane.b32.xlu0 %v2048, 80
        %v2078 = vpop.permute.xlu0 %2077
        %2081 = vrot.lane.b32.xlu0 %v2047, 96
        %v2082 = vpop.permute.xlu0 %2081
        %2083 = vrot.lane.b32.xlu0 %v2048, 96
        %v2084 = vpop.permute.xlu0 %2083
        %2087 = vrot.lane.b32.xlu0 %v2047, 112
        %v2088 = vpop.permute.xlu0 %2087
        %2089 = vrot.lane.b32.xlu0 %v2048, 112
        %v2090 = vpop.permute.xlu0 %2089
        %v2093 = vsel %vm188, %v2047, %v2052
        %v2094 = vsel %vm188, %v2048, %v2054
        %v2095 = vsel %vm191, %v2093, %v2058
        %v2096 = vsel %vm191, %v2094, %v2060
        %v2097 = vsel %vm194, %v2095, %v2064
        %v2098 = vsel %vm194, %v2096, %v2066
        %v2099 = vsel %vm197, %v2097, %v2070
        %v2100 = vsel %vm197, %v2098, %v2072
        %v2101 = vsel %vm200, %v2099, %v2076
        %v2102 = vsel %vm200, %v2100, %v2078
        %v2103 = vsel %vm203, %v2101, %v2082
        %v2104 = vsel %vm203, %v2102, %v2084
        %v2105 = vsel %vm206, %v2103, %v2088
        %v2106 = vsel %vm206, %v2104, %v2090
        %v2107 = vld [vmem:[%s1 + $0x1b] sm:$0x1]
        %v2108 = vlaneseq
        %v2109 = vshrl.u32 %v2108, 7
        %v2110 = vsub.s32 0, %v2109
        %v2111 = vrot.slane %v2107, %v2110
        %v2112 = vmul.f32 %v2111, %v2105
        %v2113 = vmul.f32 %v2111, %v2106
        %v2114 = vadd.f32 %v2045, %v2112
        %v2115 = vadd.f32 %v2046, %v2113
        %2116 = vrot.lane.b32.xlu0 %v1840, 127
        %v2117 = vpop.permute.xlu0 %2116
        %2118 = vrot.lane.b32.xlu0 %v1841, 127
        %v2119 = vpop.permute.xlu0 %2118
        %2122 = vrot.lane.b32.xlu0 %v1840, 15
        %v2123 = vpop.permute.xlu0 %2122
        %2124 = vrot.lane.b32.xlu0 %v1841, 15
        %v2125 = vpop.permute.xlu0 %2124
        %2128 = vrot.lane.b32.xlu0 %v1840, 31
        %v2129 = vpop.permute.xlu0 %2128
        %2130 = vrot.lane.b32.xlu0 %v1841, 31
        %v2131 = vpop.permute.xlu0 %2130
        %2134 = vrot.lane.b32.xlu0 %v1840, 47
        %v2135 = vpop.permute.xlu0 %2134
        %2136 = vrot.lane.b32.xlu0 %v1841, 47
        %v2137 = vpop.permute.xlu0 %2136
        %2140 = vrot.lane.b32.xlu0 %v1840, 63
        %v2141 = vpop.permute.xlu0 %2140
        %2142 = vrot.lane.b32.xlu0 %v1841, 63
        %v2143 = vpop.permute.xlu0 %2142
        %2146 = vrot.lane.b32.xlu0 %v1840, 79
        %v2147 = vpop.permute.xlu0 %2146
        %2148 = vrot.lane.b32.xlu0 %v1841, 79
        %v2149 = vpop.permute.xlu0 %2148
        %2152 = vrot.lane.b32.xlu0 %v1840, 95
        %v2153 = vpop.permute.xlu0 %2152
        %2154 = vrot.lane.b32.xlu0 %v1841, 95
        %v2155 = vpop.permute.xlu0 %2154
        %2158 = vrot.lane.b32.xlu0 %v1840, 111
        %v2159 = vpop.permute.xlu0 %2158
        %2160 = vrot.lane.b32.xlu0 %v1841, 111
        %v2161 = vpop.permute.xlu0 %2160
        %v2164 = vsel %vm188, %v2117, %v2123
        %v2165 = vsel %vm188, %v2119, %v2125
        %v2166 = vsel %vm191, %v2164, %v2129
        %v2167 = vsel %vm191, %v2165, %v2131
        %v2168 = vsel %vm194, %v2166, %v2135
        %v2169 = vsel %vm194, %v2167, %v2137
        %v2170 = vsel %vm197, %v2168, %v2141
        %v2171 = vsel %vm197, %v2169, %v2143
        %v2172 = vsel %vm200, %v2170, %v2147
        %v2173 = vsel %vm200, %v2171, %v2149
        %v2174 = vsel %vm203, %v2172, %v2153
        %v2175 = vsel %vm203, %v2173, %v2155
        %v2176 = vsel %vm206, %v2174, %v2159
        %v2177 = vsel %vm206, %v2175, %v2161
        %v2178 = vld [vmem:[%s1 + $0x1c] sm:$0x1]
        %v2179 = vlaneseq
        %v2180 = vshrl.u32 %v2179, 7
        %v2181 = vsub.s32 0, %v2180
        %v2182 = vrot.slane %v2178, %v2181
        %v2183 = vmul.f32 %v2182, %v2176
        %v2184 = vmul.f32 %v2182, %v2177
        %v2185 = vadd.f32 %v2114, %v2183
        %v2186 = vadd.f32 %v2115, %v2184
        %2187 = vrot.lane.b32.xlu0 %v1909, 127
        %v2188 = vpop.permute.xlu0 %2187
        %2189 = vrot.lane.b32.xlu0 %v1910, 127
        %v2190 = vpop.permute.xlu0 %2189
        %2193 = vrot.lane.b32.xlu0 %v1909, 15
        %v2194 = vpop.permute.xlu0 %2193
        %2195 = vrot.lane.b32.xlu0 %v1910, 15
        %v2196 = vpop.permute.xlu0 %2195
        %2199 = vrot.lane.b32.xlu0 %v1909, 31
        %v2200 = vpop.permute.xlu0 %2199
        %2201 = vrot.lane.b32.xlu0 %v1910, 31
        %v2202 = vpop.permute.xlu0 %2201
        %2205 = vrot.lane.b32.xlu0 %v1909, 47
        %v2206 = vpop.permute.xlu0 %2205
        %2207 = vrot.lane.b32.xlu0 %v1910, 47
        %v2208 = vpop.permute.xlu0 %2207
        %2211 = vrot.lane.b32.xlu0 %v1909, 63
        %v2212 = vpop.permute.xlu0 %2211
        %2213 = vrot.lane.b32.xlu0 %v1910, 63
        %v2214 = vpop.permute.xlu0 %2213
        %2217 = vrot.lane.b32.xlu0 %v1909, 79
        %v2218 = vpop.permute.xlu0 %2217
        %2219 = vrot.lane.b32.xlu0 %v1910, 79
        %v2220 = vpop.permute.xlu0 %2219
        %2223 = vrot.lane.b32.xlu0 %v1909, 95
        %v2224 = vpop.permute.xlu0 %2223
        %2225 = vrot.lane.b32.xlu0 %v1910, 95
        %v2226 = vpop.permute.xlu0 %2225
        %2229 = vrot.lane.b32.xlu0 %v1909, 111
        %v2230 = vpop.permute.xlu0 %2229
        %2231 = vrot.lane.b32.xlu0 %v1910, 111
        %v2232 = vpop.permute.xlu0 %2231
        %v2235 = vsel %vm188, %v2188, %v2194
        %v2236 = vsel %vm188, %v2190, %v2196
        %v2237 = vsel %vm191, %v2235, %v2200
        %v2238 = vsel %vm191, %v2236, %v2202
        %v2239 = vsel %vm194, %v2237, %v2206
        %v2240 = vsel %vm194, %v2238, %v2208
        %v2241 = vsel %vm197, %v2239, %v2212
        %v2242 = vsel %vm197, %v2240, %v2214
        %v2243 = vsel %vm200, %v2241, %v2218
        %v2244 = vsel %vm200, %v2242, %v2220
        %v2245 = vsel %vm203, %v2243, %v2224
        %v2246 = vsel %vm203, %v2244, %v2226
        %v2247 = vsel %vm206, %v2245, %v2230
        %v2248 = vsel %vm206, %v2246, %v2232
        %v2249 = vld [vmem:[%s1 + $0x1d] sm:$0x1]
        %v2250 = vlaneseq
        %v2251 = vshrl.u32 %v2250, 7
        %v2252 = vsub.s32 0, %v2251
        %v2253 = vrot.slane %v2249, %v2252
        %v2254 = vmul.f32 %v2253, %v2247
        %v2255 = vmul.f32 %v2253, %v2248
        %v2256 = vadd.f32 %v2185, %v2254
        %v2257 = vadd.f32 %v2186, %v2255
        %2258 = vrot.lane.b32.xlu0 %v1978, 127
        %v2259 = vpop.permute.xlu0 %2258
        %2260 = vrot.lane.b32.xlu0 %v1979, 127
        %v2261 = vpop.permute.xlu0 %2260
        %2264 = vrot.lane.b32.xlu0 %v1978, 15
        %v2265 = vpop.permute.xlu0 %2264
        %2266 = vrot.lane.b32.xlu0 %v1979, 15
        %v2267 = vpop.permute.xlu0 %2266
        %2270 = vrot.lane.b32.xlu0 %v1978, 31
        %v2271 = vpop.permute.xlu0 %2270
        %2272 = vrot.lane.b32.xlu0 %v1979, 31
        %v2273 = vpop.permute.xlu0 %2272
        %2276 = vrot.lane.b32.xlu0 %v1978, 47
        %v2277 = vpop.permute.xlu0 %2276
        %2278 = vrot.lane.b32.xlu0 %v1979, 47
        %v2279 = vpop.permute.xlu0 %2278
        %2282 = vrot.lane.b32.xlu0 %v1978, 63
        %v2283 = vpop.permute.xlu0 %2282
        %2284 = vrot.lane.b32.xlu0 %v1979, 63
        %v2285 = vpop.permute.xlu0 %2284
        %2288 = vrot.lane.b32.xlu0 %v1978, 79
        %v2289 = vpop.permute.xlu0 %2288
        %2290 = vrot.lane.b32.xlu0 %v1979, 79
        %v2291 = vpop.permute.xlu0 %2290
        %2294 = vrot.lane.b32.xlu0 %v1978, 95
        %v2295 = vpop.permute.xlu0 %2294
        %2296 = vrot.lane.b32.xlu0 %v1979, 95
        %v2297 = vpop.permute.xlu0 %2296
        %2300 = vrot.lane.b32.xlu0 %v1978, 111
        %v2301 = vpop.permute.xlu0 %2300
        %2302 = vrot.lane.b32.xlu0 %v1979, 111
        %v2303 = vpop.permute.xlu0 %2302
        %v2306 = vsel %vm188, %v2259, %v2265
        %v2307 = vsel %vm188, %v2261, %v2267
        %v2308 = vsel %vm191, %v2306, %v2271
        %v2309 = vsel %vm191, %v2307, %v2273
        %v2310 = vsel %vm194, %v2308, %v2277
        %v2311 = vsel %vm194, %v2309, %v2279
        %v2312 = vsel %vm197, %v2310, %v2283
        %v2313 = vsel %vm197, %v2311, %v2285
        %v2314 = vsel %vm200, %v2312, %v2289
        %v2315 = vsel %vm200, %v2313, %v2291
        %v2316 = vsel %vm203, %v2314, %v2295
        %v2317 = vsel %vm203, %v2315, %v2297
        %v2318 = vsel %vm206, %v2316, %v2301
        %v2319 = vsel %vm206, %v2317, %v2303
        %v2320 = vld [vmem:[%s1 + $0x1e] sm:$0x1]
        %v2321 = vlaneseq
        %v2322 = vshrl.u32 %v2321, 7
        %v2323 = vsub.s32 0, %v2322
        %v2324 = vrot.slane %v2320, %v2323
        %v2325 = vmul.f32 %v2324, %v2318
        %v2326 = vmul.f32 %v2324, %v2319
        %v2327 = vadd.f32 %v2256, %v2325
        %v2328 = vadd.f32 %v2257, %v2326
        %2329 = vrot.lane.b32.xlu0 %v2047, 127
        %v2330 = vpop.permute.xlu0 %2329
        %2331 = vrot.lane.b32.xlu0 %v2048, 127
        %v2332 = vpop.permute.xlu0 %2331
        %2335 = vrot.lane.b32.xlu0 %v2047, 15
        %v2336 = vpop.permute.xlu0 %2335
        %2337 = vrot.lane.b32.xlu0 %v2048, 15
        %v2338 = vpop.permute.xlu0 %2337
        %2341 = vrot.lane.b32.xlu0 %v2047, 31
        %v2342 = vpop.permute.xlu0 %2341
        %2343 = vrot.lane.b32.xlu0 %v2048, 31
        %v2344 = vpop.permute.xlu0 %2343
        %2347 = vrot.lane.b32.xlu0 %v2047, 47
        %v2348 = vpop.permute.xlu0 %2347
        %2349 = vrot.lane.b32.xlu0 %v2048, 47
        %v2350 = vpop.permute.xlu0 %2349
        %2353 = vrot.lane.b32.xlu0 %v2047, 63
        %v2354 = vpop.permute.xlu0 %2353
        %2355 = vrot.lane.b32.xlu0 %v2048, 63
        %v2356 = vpop.permute.xlu0 %2355
        %2359 = vrot.lane.b32.xlu0 %v2047, 79
        %v2360 = vpop.permute.xlu0 %2359
        %2361 = vrot.lane.b32.xlu0 %v2048, 79
        %v2362 = vpop.permute.xlu0 %2361
        %2365 = vrot.lane.b32.xlu0 %v2047, 95
        %v2366 = vpop.permute.xlu0 %2365
        %2367 = vrot.lane.b32.xlu0 %v2048, 95
        %v2368 = vpop.permute.xlu0 %2367
        %2371 = vrot.lane.b32.xlu0 %v2047, 111
        %v2372 = vpop.permute.xlu0 %2371
        %2373 = vrot.lane.b32.xlu0 %v2048, 111
        %v2374 = vpop.permute.xlu0 %2373
        %v2377 = vsel %vm188, %v2330, %v2336
        %v2378 = vsel %vm188, %v2332, %v2338
        %v2379 = vsel %vm191, %v2377, %v2342
        %v2380 = vsel %vm191, %v2378, %v2344
        %v2381 = vsel %vm194, %v2379, %v2348
        %v2382 = vsel %vm194, %v2380, %v2350
        %v2383 = vsel %vm197, %v2381, %v2354
        %v2384 = vsel %vm197, %v2382, %v2356
        %v2385 = vsel %vm200, %v2383, %v2360
        %v2386 = vsel %vm200, %v2384, %v2362
        %v2387 = vsel %vm203, %v2385, %v2366
        %v2388 = vsel %vm203, %v2386, %v2368
        %v2389 = vsel %vm206, %v2387, %v2372
        %v2390 = vsel %vm206, %v2388, %v2374
        %v2391 = vld [vmem:[%s1 + $0x1f] sm:$0x1]
        %v2392 = vlaneseq
        %v2393 = vshrl.u32 %v2392, 7
        %v2394 = vsub.s32 0, %v2393
        %v2395 = vrot.slane %v2391, %v2394
        %v2396 = vmul.f32 %v2395, %v2389
        %v2397 = vmul.f32 %v2395, %v2390
        %v2398 = vadd.f32 %v2327, %v2396
        %v2399 = vadd.f32 %v2328, %v2397
        %2400 = vrot.lane.b32.xlu0 %v1840, 126
        %v2401 = vpop.permute.xlu0 %2400
        %2402 = vrot.lane.b32.xlu0 %v1841, 126
        %v2403 = vpop.permute.xlu0 %2402
        %2406 = vrot.lane.b32.xlu0 %v1840, 14
        %v2407 = vpop.permute.xlu0 %2406
        %2408 = vrot.lane.b32.xlu0 %v1841, 14
        %v2409 = vpop.permute.xlu0 %2408
        %2412 = vrot.lane.b32.xlu0 %v1840, 30
        %v2413 = vpop.permute.xlu0 %2412
        %2414 = vrot.lane.b32.xlu0 %v1841, 30
        %v2415 = vpop.permute.xlu0 %2414
        %2418 = vrot.lane.b32.xlu0 %v1840, 46
        %v2419 = vpop.permute.xlu0 %2418
        %2420 = vrot.lane.b32.xlu0 %v1841, 46
        %v2421 = vpop.permute.xlu0 %2420
        %2424 = vrot.lane.b32.xlu0 %v1840, 62
        %v2425 = vpop.permute.xlu0 %2424
        %2426 = vrot.lane.b32.xlu0 %v1841, 62
        %v2427 = vpop.permute.xlu0 %2426
        %2430 = vrot.lane.b32.xlu0 %v1840, 78
        %v2431 = vpop.permute.xlu0 %2430
        %2432 = vrot.lane.b32.xlu0 %v1841, 78
        %v2433 = vpop.permute.xlu0 %2432
        %2436 = vrot.lane.b32.xlu0 %v1840, 94
        %v2437 = vpop.permute.xlu0 %2436
        %2438 = vrot.lane.b32.xlu0 %v1841, 94
        %v2439 = vpop.permute.xlu0 %2438
        %2442 = vrot.lane.b32.xlu0 %v1840, 110
        %v2443 = vpop.permute.xlu0 %2442
        %2444 = vrot.lane.b32.xlu0 %v1841, 110
        %v2445 = vpop.permute.xlu0 %2444
        %v2448 = vsel %vm188, %v2401, %v2407
        %v2449 = vsel %vm188, %v2403, %v2409
        %v2450 = vsel %vm191, %v2448, %v2413
        %v2451 = vsel %vm191, %v2449, %v2415
        %v2452 = vsel %vm194, %v2450, %v2419
        %v2453 = vsel %vm194, %v2451, %v2421
        %v2454 = vsel %vm197, %v2452, %v2425
        %v2455 = vsel %vm197, %v2453, %v2427
        %v2456 = vsel %vm200, %v2454, %v2431
        %v2457 = vsel %vm200, %v2455, %v2433
        %v2458 = vsel %vm203, %v2456, %v2437
        %v2459 = vsel %vm203, %v2457, %v2439
        %v2460 = vsel %vm206, %v2458, %v2443
        %v2461 = vsel %vm206, %v2459, %v2445
        %v2462 = vld [vmem:[%s1 + $0x20] sm:$0x1]
        %v2463 = vlaneseq
        %v2464 = vshrl.u32 %v2463, 7
        %v2465 = vsub.s32 0, %v2464
        %v2466 = vrot.slane %v2462, %v2465
        %v2467 = vmul.f32 %v2466, %v2460
        %v2468 = vmul.f32 %v2466, %v2461
        %v2469 = vadd.f32 %v2398, %v2467
        %v2470 = vadd.f32 %v2399, %v2468
        %2471 = vrot.lane.b32.xlu0 %v1909, 126
        %v2472 = vpop.permute.xlu0 %2471
        %2473 = vrot.lane.b32.xlu0 %v1910, 126
        %v2474 = vpop.permute.xlu0 %2473
        %2477 = vrot.lane.b32.xlu0 %v1909, 14
        %v2478 = vpop.permute.xlu0 %2477
        %2479 = vrot.lane.b32.xlu0 %v1910, 14
        %v2480 = vpop.permute.xlu0 %2479
        %2483 = vrot.lane.b32.xlu0 %v1909, 30
        %v2484 = vpop.permute.xlu0 %2483
        %2485 = vrot.lane.b32.xlu0 %v1910, 30
        %v2486 = vpop.permute.xlu0 %2485
        %2489 = vrot.lane.b32.xlu0 %v1909, 46
        %v2490 = vpop.permute.xlu0 %2489
        %2491 = vrot.lane.b32.xlu0 %v1910, 46
        %v2492 = vpop.permute.xlu0 %2491
        %2495 = vrot.lane.b32.xlu0 %v1909, 62
        %v2496 = vpop.permute.xlu0 %2495
        %2497 = vrot.lane.b32.xlu0 %v1910, 62
        %v2498 = vpop.permute.xlu0 %2497
        %2501 = vrot.lane.b32.xlu0 %v1909, 78
        %v2502 = vpop.permute.xlu0 %2501
        %2503 = vrot.lane.b32.xlu0 %v1910, 78
        %v2504 = vpop.permute.xlu0 %2503
        %2507 = vrot.lane.b32.xlu0 %v1909, 94
        %v2508 = vpop.permute.xlu0 %2507
        %2509 = vrot.lane.b32.xlu0 %v1910, 94
        %v2510 = vpop.permute.xlu0 %2509
        %2513 = vrot.lane.b32.xlu0 %v1909, 110
        %v2514 = vpop.permute.xlu0 %2513
        %2515 = vrot.lane.b32.xlu0 %v1910, 110
        %v2516 = vpop.permute.xlu0 %2515
        %v2519 = vsel %vm188, %v2472, %v2478
        %v2520 = vsel %vm188, %v2474, %v2480
        %v2521 = vsel %vm191, %v2519, %v2484
        %v2522 = vsel %vm191, %v2520, %v2486
        %v2523 = vsel %vm194, %v2521, %v2490
        %v2524 = vsel %vm194, %v2522, %v2492
        %v2525 = vsel %vm197, %v2523, %v2496
        %v2526 = vsel %vm197, %v2524, %v2498
        %v2527 = vsel %vm200, %v2525, %v2502
        %v2528 = vsel %vm200, %v2526, %v2504
        %v2529 = vsel %vm203, %v2527, %v2508
        %v2530 = vsel %vm203, %v2528, %v2510
        %v2531 = vsel %vm206, %v2529, %v2514
        %v2532 = vsel %vm206, %v2530, %v2516
        %v2533 = vld [vmem:[%s1 + $0x21] sm:$0x1]
        %v2534 = vlaneseq
        %v2535 = vshrl.u32 %v2534, 7
        %v2536 = vsub.s32 0, %v2535
        %v2537 = vrot.slane %v2533, %v2536
        %v2538 = vmul.f32 %v2537, %v2531
        %v2539 = vmul.f32 %v2537, %v2532
        %v2540 = vadd.f32 %v2469, %v2538
        %v2541 = vadd.f32 %v2470, %v2539
        %2542 = vrot.lane.b32.xlu0 %v1978, 126
        %v2543 = vpop.permute.xlu0 %2542
        %2544 = vrot.lane.b32.xlu0 %v1979, 126
        %v2545 = vpop.permute.xlu0 %2544
        %2548 = vrot.lane.b32.xlu0 %v1978, 14
        %v2549 = vpop.permute.xlu0 %2548
        %2550 = vrot.lane.b32.xlu0 %v1979, 14
        %v2551 = vpop.permute.xlu0 %2550
        %2554 = vrot.lane.b32.xlu0 %v1978, 30
        %v2555 = vpop.permute.xlu0 %2554
        %2556 = vrot.lane.b32.xlu0 %v1979, 30
        %v2557 = vpop.permute.xlu0 %2556
        %2560 = vrot.lane.b32.xlu0 %v1978, 46
        %v2561 = vpop.permute.xlu0 %2560
        %2562 = vrot.lane.b32.xlu0 %v1979, 46
        %v2563 = vpop.permute.xlu0 %2562
        %2566 = vrot.lane.b32.xlu0 %v1978, 62
        %v2567 = vpop.permute.xlu0 %2566
        %2568 = vrot.lane.b32.xlu0 %v1979, 62
        %v2569 = vpop.permute.xlu0 %2568
        %2572 = vrot.lane.b32.xlu0 %v1978, 78
        %v2573 = vpop.permute.xlu0 %2572
        %2574 = vrot.lane.b32.xlu0 %v1979, 78
        %v2575 = vpop.permute.xlu0 %2574
        %2578 = vrot.lane.b32.xlu0 %v1978, 94
        %v2579 = vpop.permute.xlu0 %2578
        %2580 = vrot.lane.b32.xlu0 %v1979, 94
        %v2581 = vpop.permute.xlu0 %2580
        %2584 = vrot.lane.b32.xlu0 %v1978, 110
        %v2585 = vpop.permute.xlu0 %2584
        %2586 = vrot.lane.b32.xlu0 %v1979, 110
        %v2587 = vpop.permute.xlu0 %2586
        %v2590 = vsel %vm188, %v2543, %v2549
        %v2591 = vsel %vm188, %v2545, %v2551
        %v2592 = vsel %vm191, %v2590, %v2555
        %v2593 = vsel %vm191, %v2591, %v2557
        %v2594 = vsel %vm194, %v2592, %v2561
        %v2595 = vsel %vm194, %v2593, %v2563
        %v2596 = vsel %vm197, %v2594, %v2567
        %v2597 = vsel %vm197, %v2595, %v2569
        %v2598 = vsel %vm200, %v2596, %v2573
        %v2599 = vsel %vm200, %v2597, %v2575
        %v2600 = vsel %vm203, %v2598, %v2579
        %v2601 = vsel %vm203, %v2599, %v2581
        %v2602 = vsel %vm206, %v2600, %v2585
        %v2603 = vsel %vm206, %v2601, %v2587
        %v2604 = vld [vmem:[%s1 + $0x22] sm:$0x1]
        %v2605 = vlaneseq
        %v2606 = vshrl.u32 %v2605, 7
        %v2607 = vsub.s32 0, %v2606
        %v2608 = vrot.slane %v2604, %v2607
        %v2609 = vmul.f32 %v2608, %v2602
        %v2610 = vmul.f32 %v2608, %v2603
        %v2611 = vadd.f32 %v2540, %v2609
        %v2612 = vadd.f32 %v2541, %v2610
        %2613 = vrot.lane.b32.xlu0 %v2047, 126
        %v2614 = vpop.permute.xlu0 %2613
        %2615 = vrot.lane.b32.xlu0 %v2048, 126
        %v2616 = vpop.permute.xlu0 %2615
        %2619 = vrot.lane.b32.xlu0 %v2047, 14
        %v2620 = vpop.permute.xlu0 %2619
        %2621 = vrot.lane.b32.xlu0 %v2048, 14
        %v2622 = vpop.permute.xlu0 %2621
        %2625 = vrot.lane.b32.xlu0 %v2047, 30
        %v2626 = vpop.permute.xlu0 %2625
        %2627 = vrot.lane.b32.xlu0 %v2048, 30
        %v2628 = vpop.permute.xlu0 %2627
        %2631 = vrot.lane.b32.xlu0 %v2047, 46
        %v2632 = vpop.permute.xlu0 %2631
        %2633 = vrot.lane.b32.xlu0 %v2048, 46
        %v2634 = vpop.permute.xlu0 %2633
        %2637 = vrot.lane.b32.xlu0 %v2047, 62
        %v2638 = vpop.permute.xlu0 %2637
        %2639 = vrot.lane.b32.xlu0 %v2048, 62
        %v2640 = vpop.permute.xlu0 %2639
        %2643 = vrot.lane.b32.xlu0 %v2047, 78
        %v2644 = vpop.permute.xlu0 %2643
        %2645 = vrot.lane.b32.xlu0 %v2048, 78
        %v2646 = vpop.permute.xlu0 %2645
        %2649 = vrot.lane.b32.xlu0 %v2047, 94
        %v2650 = vpop.permute.xlu0 %2649
        %2651 = vrot.lane.b32.xlu0 %v2048, 94
        %v2652 = vpop.permute.xlu0 %2651
        %2655 = vrot.lane.b32.xlu0 %v2047, 110
        %v2656 = vpop.permute.xlu0 %2655
        %2657 = vrot.lane.b32.xlu0 %v2048, 110
        %v2658 = vpop.permute.xlu0 %2657
        %v2661 = vsel %vm188, %v2614, %v2620
        %v2662 = vsel %vm188, %v2616, %v2622
        %v2663 = vsel %vm191, %v2661, %v2626
        %v2664 = vsel %vm191, %v2662, %v2628
        %v2665 = vsel %vm194, %v2663, %v2632
        %v2666 = vsel %vm194, %v2664, %v2634
        %v2667 = vsel %vm197, %v2665, %v2638
        %v2668 = vsel %vm197, %v2666, %v2640
        %v2669 = vsel %vm200, %v2667, %v2644
        %v2670 = vsel %vm200, %v2668, %v2646
        %v2671 = vsel %vm203, %v2669, %v2650
        %v2672 = vsel %vm203, %v2670, %v2652
        %v2673 = vsel %vm206, %v2671, %v2656
        %v2674 = vsel %vm206, %v2672, %v2658
        %v2675 = vld [vmem:[%s1 + $0x23] sm:$0x1]
        %v2676 = vlaneseq
        %v2677 = vshrl.u32 %v2676, 7
        %v2678 = vsub.s32 0, %v2677
        %v2679 = vrot.slane %v2675, %v2678
        %v2680 = vmul.f32 %v2679, %v2673
        %v2681 = vmul.f32 %v2679, %v2674
        %v2682 = vadd.f32 %v2611, %v2680
        %v2683 = vadd.f32 %v2612, %v2681
        %v2684 = vmax.f32 %v2682, 0.0
        %v2685 = vmax.f32 %v2683, 0.0
        %2686 = vst [vmem:[%s136] sm:$0xff] %v2684
        %2687 = vst [vmem:[%s136 + $0x8] sm:$0xff] %v2685
        %s2688 = sand.u32 %s71, 1
        %s2689 = scalar_lea.sflag [#allocation3], %s2688
        %s2690 = sand.u32 %s71, 1
        %s2691 = smul.addr %s2690, 16
        %s2692 = scalar_lea.vmem [#allocation2], %s2691
        // Predicated region
        $region29: #{tpu_custom_call.1} parent=27 // pred_check
          %p2693 = pneg %p81
        $region30: #{tpu_custom_call.1} parent=27 // pred_check_branch
          %2695 = sbr.rel (%p2693) target = $region32
        $region31: #{tpu_custom_call.1} parent=27 // pred_region
          %s2697 = ssub.s32 256, 256
          %2698 = vsyncadd %s2689, %s2697
          %s2699 = smul.addr %s16, 2
          %s2700 = smul.addr %s2699, 128
          %s2701 = scalar_lea.hbm %s2, %s2700
          %s2702 = sshll.u32 %s2692, 4
          %s2703 = int_to_ptr.vmem [resolvable:$true] %s2702
          %2708 = dma.vmem_to_hbm [thread:$0]  %s2703, 256, %s2701, %s2689, 128, 128, 8
        $region32: #{tpu_custom_call.1} parent=27 // pred_fallthru
          _
      $region28: #{tpu_custom_call.1} parent=5 // pred_fallthru
        _
      %p2709 = scmp.le.s32.totalorder 2, %s11
      // Predicated region
      $region33: #{tpu_custom_call.1} parent=5 // pred_check
        %p2710 = pneg %p2709
      $region34: #{tpu_custom_call.1} parent=5 // pred_check_branch
        %2712 = sbr.rel (%p2710) target = $region36
      $region35: #{tpu_custom_call.1} parent=5 // pred_region
        %s2713 = ssub.s32 %s11, 2
        // Predicated region
        $region37: #{tpu_custom_call.1} parent=35 // pred_check
          %p2714 = pneg %p87
        $region38: #{tpu_custom_call.1} parent=35 // pred_check_branch
          %2716 = sbr.rel (%p2714) target = $region40
        $region39: #{tpu_custom_call.1} parent=35 // pred_region
          %s2717 = sand.u32 %s72, 1
          %s2718 = scalar_lea.sflag [#allocation3], %s2717
          %s2719 = sand.u32 %s72, 1
          %s2720 = smul.addr %s2719, 16
          %s2721 = scalar_lea.vmem [#allocation2], %s2720
          %2722 = dma.done %s2718, 256
        $region40: #{tpu_custom_call.1} parent=35 // pred_fallthru
          _
      $region36: #{tpu_custom_call.1} parent=5 // pred_fallthru
        _
    $region6: #{tpu_custom_call.1} parent=1 // loop_footer
      %s15 = sadd.s32 1, %s11
    $region7: #{tpu_custom_call.1} parent=1 // loop_footer_branch
      %10 = sbr.rel target = $region3
    $region8: #{tpu_custom_call.1} parent=1 // loop_exit
      _
    %2723 = vsyncpa [#allocation3], 1
    %s2724 = scalar_lea.sflag [#allocation3], 1
    %2725 = vsyncpa %s2724, 1

</llo_original>
